<compile_context>
chip_gen: v7x
topology: tpu7x:2x2x1
jax: 0.10.0
libtpu: 0.0.40
codegen_flags: <defaults>
</compile_context>

<pallas_src>
import functools

import numpy as np
import jax
import jax.numpy as jnp
from jax.experimental import pallas as pl
from jax.experimental.pallas import tpu as pltpu

# Keep both the in-kernel MXU matmuls and the pure-JAX reference at full f32 precision.
jax.config.update("jax_default_matmul_precision", "highest")

_A = 0.49
_EPS = float(np.finfo(np.float32).eps)


def soft_lrelu(x):
    # (1 - a) * x + a * sqrt(x*x + eps*eps) - a * eps   (identical to the PyTorch helper)
    return (1.0 - _A) * x + _A * jnp.sqrt(x * x + _EPS * _EPS) - _A * _EPS


# ------------------------------ fused Pallas kernel ------------------------------

def _mlp_kernel(*refs, n_hidden, apply_sigmoid):
    # refs = (x, w_in, b_in, (w_h, b_h) * n_hidden, w_out, b_out, [sigmoid_mask], out)
    x_ref = refs[0]
    out_ref = refs[-1]
    if apply_sigmoid:
        mask_ref = refs[-2]
        w_refs = refs[1:-2]
    else:
        mask_ref = None
        w_refs = refs[1:-1]

    prec = jax.lax.Precision.HIGHEST

    def linear(h, w_ref, b_ref):
        return jnp.dot(h, w_ref[...], preferred_element_type=jnp.float32,
                       precision=prec) + b_ref[...]

    # input2hidden + activation
    h = soft_lrelu(linear(x_ref[...], w_refs[0], w_refs[1]))
    # hidden_layers: (Linear -> activation) * n_hidden
    for k in range(n_hidden):
        h = soft_lrelu(linear(h, w_refs[2 + 2 * k], w_refs[3 + 2 * k]))
    # hidden2output (no activation)
    y = linear(h, w_refs[-2], w_refs[-1])
    # optional per-column sigmoid (binary_out); default binary_out is all zeros -> skipped
    if apply_sigmoid:
        y = jnp.where(mask_ref[...] > 0.0, jax.nn.sigmoid(y), y)
    out_ref[...] = y


def mlp_forward(x, params, binary_out=None, *, block_b=128):
    """Fused MLP forward.

    params = (w_in, b_in, [(w_h, b_h), ...], w_out, b_out); weights are (in, out),
    biases are (1, out), all float32.
    """
    w_in, b_in, hidden, w_out, b_out = params
    B, d_in = x.shape
    d_out = w_out.shape[1]
    n_hidden = len(hidden)

    apply_sigmoid = binary_out is not None and bool(np.any(np.asarray(binary_out)))

    flat_w = [w_in, b_in]
    for (wh, bh) in hidden:
        flat_w += [wh, bh]
    flat_w += [w_out, b_out]
    extra = []
    if apply_sigmoid:
        extra = [jnp.asarray(np.asarray(binary_out), jnp.float32).reshape(1, d_out)]

    # Batch tiling: one grid axis over batch, marked "parallel".
    tm = min(block_b, B)
    pad = (-B) % tm
    x_p = jnp.pad(x, ((0, pad), (0, 0))) if pad else x
    bp = B + pad
    grid = (bp // tm,)

    kernel = functools.partial(_mlp_kernel, n_hidden=n_hidden,
                               apply_sigmoid=apply_sigmoid)

    in_specs = [pl.BlockSpec((tm, d_in), lambda i: (i, 0))]
    # Weights / biases / mask are small: keep the full arrays resident in VMEM each step.
    in_specs += [pl.BlockSpec(w.shape, lambda i: (0, 0)) for w in flat_w + extra]

    out = pl.pallas_call(
        kernel,
        out_shape=jax.ShapeDtypeStruct((bp, d_out), jnp.float32),
        grid=grid,
        in_specs=in_specs,
        out_specs=pl.BlockSpec((tm, d_out), lambda i: (i, 0)),
        compiler_params=pltpu.CompilerParams(dimension_semantics=("parallel",)),
    )(x_p, *flat_w, *extra)

    return out[:B] if pad else out


# ------------------------------ pure-JAX reference ------------------------------

def ref_mlp(x, params, binary_out=None):
    w_in, b_in, hidden, w_out, b_out = params
    h = soft_lrelu(x @ w_in + b_in)
    for (wh, bh) in hidden:
        h = soft_lrelu(h @ wh + bh)
    y = h @ w_out + b_out
    if binary_out is not None and np.any(np.asarray(binary_out)):
        mask = jnp.asarray(np.asarray(binary_out), jnp.float32).reshape(1, -1)
        y = jnp.where(mask > 0.0, jax.nn.sigmoid(y), y)
    return y


# ------------------------- deterministic parameter init -------------------------

def _uniform(key, shape, bound):
    return jax.random.uniform(key, shape, jnp.float32, -bound, bound)


def init_mlp_params(key, d_in, d_out, layers):
    """PyTorch nn.Linear-style U(-1/sqrt(fan_in), 1/sqrt(fan_in)) init, deterministic."""
    dims = [d_in] + list(layers) + [d_out]
    keys = jax.random.split(key, 2 * (len(dims) - 1))
    mats = []
    for li in range(len(dims) - 1):
        bnd = 1.0 / np.sqrt(dims[li])
        w = _uniform(keys[2 * li], (dims[li], dims[li + 1]), bnd)
        b = _uniform(keys[2 * li + 1], (1, dims[li + 1]), bnd)
        mats.append((w, b))
    (w_in, b_in) = mats[0]
    (w_out, b_out) = mats[-1]
    hidden = mats[1:-1]
    return (w_in, b_in, hidden, w_out, b_out)


# ------------------------------------- main -------------------------------------

if __name__ == "__main__":
    B, d_in, d_out = 8, 16, 4
    layers = [32, 32, 32]          # MLP default

    key = jax.random.PRNGKey(0)
    k_x, k_p = jax.random.split(key)
    x = jax.random.normal(k_x, (B, d_in), jnp.float32)
    params = init_mlp_params(k_p, d_in, d_out, layers)
    binary_out = np.zeros(d_out, np.float32)   # MLP default -> no sigmoid applied

    y = jax.block_until_ready(mlp_forward(x, params, binary_out))
    y_ref = ref_mlp(x, params, binary_out)
    np.testing.assert_allclose(np.asarray(y), np.asarray(y_ref), rtol=1e-3, atol=1e-3)

    print("KERNEL_OK")
</pallas_src>

<mosaic_0001>
module attributes {stable_mosaic.version = 11 : i64} {
  func.func @_mlp_kernel(%arg0: i32, %arg1: memref<8x16xf32, #tpu.memory_space<vmem>>, %arg2: memref<16x32xf32, #tpu.memory_space<vmem>>, %arg3: memref<1x32xf32, #tpu.memory_space<vmem>>, %arg4: memref<32x32xf32, #tpu.memory_space<vmem>>, %arg5: memref<1x32xf32, #tpu.memory_space<vmem>>, %arg6: memref<32x32xf32, #tpu.memory_space<vmem>>, %arg7: memref<1x32xf32, #tpu.memory_space<vmem>>, %arg8: memref<32x4xf32, #tpu.memory_space<vmem>>, %arg9: memref<1x4xf32, #tpu.memory_space<vmem>>, %arg10: memref<8x4xf32, #tpu.memory_space<vmem>>) attributes {dimension_semantics = [#tpu.dimension_semantics<parallel>], iteration_bounds = array<i64: 1>, scalar_prefetch = 0 : i64, scratch_operands = 0 : i64, tpu.core_type = #tpu.core_type<tc>, window_params = [{transform_indices = @transform_0, window_bounds = array<i64: 8, 16>}, {pipeline_mode = #tpu.pipeline_mode<synchronous>, transform_indices = @transform_1, window_bounds = array<i64: 16, 32>}, {pipeline_mode = #tpu.pipeline_mode<synchronous>, transform_indices = @transform_2, window_bounds = array<i64: 1, 32>}, {pipeline_mode = #tpu.pipeline_mode<synchronous>, transform_indices = @transform_3, window_bounds = array<i64: 32, 32>}, {pipeline_mode = #tpu.pipeline_mode<synchronous>, transform_indices = @transform_4, window_bounds = array<i64: 1, 32>}, {pipeline_mode = #tpu.pipeline_mode<synchronous>, transform_indices = @transform_5, window_bounds = array<i64: 32, 32>}, {pipeline_mode = #tpu.pipeline_mode<synchronous>, transform_indices = @transform_6, window_bounds = array<i64: 1, 32>}, {pipeline_mode = #tpu.pipeline_mode<synchronous>, transform_indices = @transform_7, window_bounds = array<i64: 32, 4>}, {pipeline_mode = #tpu.pipeline_mode<synchronous>, transform_indices = @transform_8, window_bounds = array<i64: 1, 4>}, {transform_indices = @transform_9, window_bounds = array<i64: 8, 4>}]} {
    %c0 = arith.constant 0 : index
    %c0_0 = arith.constant 0 : index
    %0 = vector.load %arg1[%c0, %c0_0] : memref<8x16xf32, #tpu.memory_space<vmem>>, vector<8x16xf32>
    %c0_1 = arith.constant 0 : index
    %c0_2 = arith.constant 0 : index
    %1 = vector.load %arg2[%c0_1, %c0_2] : memref<16x32xf32, #tpu.memory_space<vmem>>, vector<16x32xf32>
    %cst = arith.constant dense<0.000000e+00> : vector<8x32xf32>
    %2 = tpu.matmul %0, %1, %cst {dimension_numbers = #tpu.dot_dimension_numbers<[1], [0], [0], [1], [0, 0, 1, 1], [], []>, precision = #tpu.contract_precision<fp32>} : vector<8x16xf32>, vector<16x32xf32>, vector<8x32xf32> -> vector<8x32xf32>
    %c0_3 = arith.constant 0 : index
    %c0_4 = arith.constant 0 : index
    %3 = vector.load %arg3[%c0_3, %c0_4] : memref<1x32xf32, #tpu.memory_space<vmem>>, vector<1x32xf32>
    %4 = vector.broadcast %3 : vector<1x32xf32> to vector<8x32xf32>
    %5 = arith.addf %2, %4 : vector<8x32xf32>
    %cst_5 = arith.constant 5.100000e-01 : f32
    %6 = vector.broadcast %cst_5 : f32 to vector<8x32xf32>
    %7 = arith.mulf %6, %5 : vector<8x32xf32>
    %8 = arith.mulf %5, %5 : vector<8x32xf32>
    %cst_6 = arith.constant 1.42108547E-14 : f32
    %9 = vector.broadcast %cst_6 : f32 to vector<8x32xf32>
    %10 = arith.addf %8, %9 : vector<8x32xf32>
    %11 = math.sqrt %10 : vector<8x32xf32>
    %cst_7 = arith.constant 4.900000e-01 : f32
    %12 = vector.broadcast %cst_7 : f32 to vector<8x32xf32>
    %13 = arith.mulf %12, %11 : vector<8x32xf32>
    %14 = arith.addf %7, %13 : vector<8x32xf32>
    %cst_8 = arith.constant 5.8412553E-8 : f32
    %15 = vector.broadcast %cst_8 : f32 to vector<8x32xf32>
    %16 = arith.subf %14, %15 : vector<8x32xf32>
    %c0_9 = arith.constant 0 : index
    %c0_10 = arith.constant 0 : index
    %17 = vector.load %arg4[%c0_9, %c0_10] : memref<32x32xf32, #tpu.memory_space<vmem>>, vector<32x32xf32>
    %cst_11 = arith.constant dense<0.000000e+00> : vector<8x32xf32>
    %18 = tpu.matmul %16, %17, %cst_11 {dimension_numbers = #tpu.dot_dimension_numbers<[1], [0], [0], [1], [0, 0, 1, 1], [], []>, precision = #tpu.contract_precision<fp32>} : vector<8x32xf32>, vector<32x32xf32>, vector<8x32xf32> -> vector<8x32xf32>
    %c0_12 = arith.constant 0 : index
    %c0_13 = arith.constant 0 : index
    %19 = vector.load %arg5[%c0_12, %c0_13] : memref<1x32xf32, #tpu.memory_space<vmem>>, vector<1x32xf32>
    %20 = vector.broadcast %19 : vector<1x32xf32> to vector<8x32xf32>
    %21 = arith.addf %18, %20 : vector<8x32xf32>
    %cst_14 = arith.constant 5.100000e-01 : f32
    %22 = vector.broadcast %cst_14 : f32 to vector<8x32xf32>
    %23 = arith.mulf %22, %21 : vector<8x32xf32>
    %24 = arith.mulf %21, %21 : vector<8x32xf32>
    %cst_15 = arith.constant 1.42108547E-14 : f32
    %25 = vector.broadcast %cst_15 : f32 to vector<8x32xf32>
    %26 = arith.addf %24, %25 : vector<8x32xf32>
    %27 = math.sqrt %26 : vector<8x32xf32>
    %cst_16 = arith.constant 4.900000e-01 : f32
    %28 = vector.broadcast %cst_16 : f32 to vector<8x32xf32>
    %29 = arith.mulf %28, %27 : vector<8x32xf32>
    %30 = arith.addf %23, %29 : vector<8x32xf32>
    %cst_17 = arith.constant 5.8412553E-8 : f32
    %31 = vector.broadcast %cst_17 : f32 to vector<8x32xf32>
    %32 = arith.subf %30, %31 : vector<8x32xf32>
    %c0_18 = arith.constant 0 : index
    %c0_19 = arith.constant 0 : index
    %33 = vector.load %arg6[%c0_18, %c0_19] : memref<32x32xf32, #tpu.memory_space<vmem>>, vector<32x32xf32>
    %cst_20 = arith.constant dense<0.000000e+00> : vector<8x32xf32>
    %34 = tpu.matmul %32, %33, %cst_20 {dimension_numbers = #tpu.dot_dimension_numbers<[1], [0], [0], [1], [0, 0, 1, 1], [], []>, precision = #tpu.contract_precision<fp32>} : vector<8x32xf32>, vector<32x32xf32>, vector<8x32xf32> -> vector<8x32xf32>
    %c0_21 = arith.constant 0 : index
    %c0_22 = arith.constant 0 : index
    %35 = vector.load %arg7[%c0_21, %c0_22] : memref<1x32xf32, #tpu.memory_space<vmem>>, vector<1x32xf32>
    %36 = vector.broadcast %35 : vector<1x32xf32> to vector<8x32xf32>
    %37 = arith.addf %34, %36 : vector<8x32xf32>
    %cst_23 = arith.constant 5.100000e-01 : f32
    %38 = vector.broadcast %cst_23 : f32 to vector<8x32xf32>
    %39 = arith.mulf %38, %37 : vector<8x32xf32>
    %40 = arith.mulf %37, %37 : vector<8x32xf32>
    %cst_24 = arith.constant 1.42108547E-14 : f32
    %41 = vector.broadcast %cst_24 : f32 to vector<8x32xf32>
    %42 = arith.addf %40, %41 : vector<8x32xf32>
    %43 = math.sqrt %42 : vector<8x32xf32>
    %cst_25 = arith.constant 4.900000e-01 : f32
    %44 = vector.broadcast %cst_25 : f32 to vector<8x32xf32>
    %45 = arith.mulf %44, %43 : vector<8x32xf32>
    %46 = arith.addf %39, %45 : vector<8x32xf32>
    %cst_26 = arith.constant 5.8412553E-8 : f32
    %47 = vector.broadcast %cst_26 : f32 to vector<8x32xf32>
    %48 = arith.subf %46, %47 : vector<8x32xf32>
    %c0_27 = arith.constant 0 : index
    %c0_28 = arith.constant 0 : index
    %49 = vector.load %arg8[%c0_27, %c0_28] : memref<32x4xf32, #tpu.memory_space<vmem>>, vector<32x4xf32>
    %cst_29 = arith.constant dense<0.000000e+00> : vector<8x4xf32>
    %50 = tpu.matmul %48, %49, %cst_29 {dimension_numbers = #tpu.dot_dimension_numbers<[1], [0], [0], [1], [0, 0, 1, 1], [], []>, precision = #tpu.contract_precision<fp32>} : vector<8x32xf32>, vector<32x4xf32>, vector<8x4xf32> -> vector<8x4xf32>
    %c0_30 = arith.constant 0 : index
    %c0_31 = arith.constant 0 : index
    %51 = vector.load %arg9[%c0_30, %c0_31] : memref<1x4xf32, #tpu.memory_space<vmem>>, vector<1x4xf32>
    %52 = vector.broadcast %51 : vector<1x4xf32> to vector<8x4xf32>
    %53 = arith.addf %50, %52 : vector<8x4xf32>
    %c0_32 = arith.constant 0 : index
    %c0_33 = arith.constant 0 : index
    %54 = vector.load %arg10[%c0_32, %c0_33] : memref<8x4xf32, #tpu.memory_space<vmem>>, vector<8x4xf32>
    tpu.vector_store %arg10[%c0_32, %c0_33], %53 {strides = array<i32>} : memref<8x4xf32, #tpu.memory_space<vmem>>, vector<8x4xf32>,
    return
  }
  func.func @transform_0(%arg0: i32) -> (i32, i32) {
    %c0_i32 = arith.constant 0 : i32
    %c0_i32_0 = arith.constant 0 : i32
    return %arg0, %c0_i32 : i32, i32
  }
  func.func @transform_1(%arg0: i32) -> (i32, i32) {
    %c0_i32 = arith.constant 0 : i32
    %c0_i32_0 = arith.constant 0 : i32
    %c0_i32_1 = arith.constant 0 : i32
    return %c0_i32, %c0_i32_0 : i32, i32
  }
  func.func @transform_2(%arg0: i32) -> (i32, i32) {
    %c0_i32 = arith.constant 0 : i32
    %c0_i32_0 = arith.constant 0 : i32
    %c0_i32_1 = arith.constant 0 : i32
    return %c0_i32, %c0_i32_0 : i32, i32
  }
  func.func @transform_3(%arg0: i32) -> (i32, i32) {
    %c0_i32 = arith.constant 0 : i32
    %c0_i32_0 = arith.constant 0 : i32
    %c0_i32_1 = arith.constant 0 : i32
    return %c0_i32, %c0_i32_0 : i32, i32
  }
  func.func @transform_4(%arg0: i32) -> (i32, i32) {
    %c0_i32 = arith.constant 0 : i32
    %c0_i32_0 = arith.constant 0 : i32
    %c0_i32_1 = arith.constant 0 : i32
    return %c0_i32, %c0_i32_0 : i32, i32
  }
  func.func @transform_5(%arg0: i32) -> (i32, i32) {
    %c0_i32 = arith.constant 0 : i32
    %c0_i32_0 = arith.constant 0 : i32
    %c0_i32_1 = arith.constant 0 : i32
    return %c0_i32, %c0_i32_0 : i32, i32
  }
  func.func @transform_6(%arg0: i32) -> (i32, i32) {
    %c0_i32 = arith.constant 0 : i32
    %c0_i32_0 = arith.constant 0 : i32
    %c0_i32_1 = arith.constant 0 : i32
    return %c0_i32, %c0_i32_0 : i32, i32
  }
  func.func @transform_7(%arg0: i32) -> (i32, i32) {
    %c0_i32 = arith.constant 0 : i32
    %c0_i32_0 = arith.constant 0 : i32
    %c0_i32_1 = arith.constant 0 : i32
    return %c0_i32, %c0_i32_0 : i32, i32
  }
  func.func @transform_8(%arg0: i32) -> (i32, i32) {
    %c0_i32 = arith.constant 0 : i32
    %c0_i32_0 = arith.constant 0 : i32
    %c0_i32_1 = arith.constant 0 : i32
    return %c0_i32, %c0_i32_0 : i32, i32
  }
  func.func @transform_9(%arg0: i32) -> (i32, i32) {
    %c0_i32 = arith.constant 0 : i32
    %c0_i32_0 = arith.constant 0 : i32
    return %arg0, %c0_i32 : i32, i32
  }
}

</mosaic_0001>

<llo_original>
// kernel: tpu_custom_call.1
$region0: #{tpu_custom_call.1}
  #allocation0 [shape = 'u32[]', space=smem, size = 0x4, offset = 0x4, fixed_abs, tag = 'smem constant byte address 0x4 - core index']
  #allocation1 [shape = 'u32[144,128]{1,0:T(1,128)}', space=vmem, size = 0x12000, scoped, tag = 'internal scratch']
  %s0 = inlined_call_operand.vmem [shape: f32[8,16], index: 0, kind: input, shape index: {}]
  %s1 = inlined_call_operand.hbm [shape: f32[16,32], index: 1, kind: input, shape index: {}]
  %s2 = inlined_call_operand.vmem [shape: f32[1,32], index: 2, kind: input, shape index: {}]
  %s3 = inlined_call_operand.vmem [shape: f32[32,32], index: 3, kind: input, shape index: {}]
  %s4 = inlined_call_operand.vmem [shape: f32[1,32], index: 4, kind: input, shape index: {}]
  %s5 = inlined_call_operand.hbm [shape: f32[32,32], index: 5, kind: input, shape index: {}]
  %s6 = inlined_call_operand.vmem [shape: f32[1,32], index: 6, kind: input, shape index: {}]
  %s7 = inlined_call_operand.vmem [shape: f32[32,4], index: 7, kind: input, shape index: {}]
  %s8 = inlined_call_operand.vmem [shape: f32[1,4], index: 8, kind: input, shape index: {}]
  %s9 = inlined_call_operand.vmem [shape: f32[8,4], index: 9, kind: output, shape index: {}]
  %s10 = sld [smem:[#allocation0]]
  $region54: #{tpu_custom_call.1} parent=0
    _
  %s12 = ssub.s32 1, %s10
  %s13 = scalar_select 0, %s12, %s10
  $region1: #{tpu_custom_call.1} parent=0
    #allocation2 [shape = 'u8[8192]{0}', space=vmem, size = 0x2000, scoped, tag = 'input window, operand 1, single buffered']
    #allocation3 [shape = 's32[1]{0}', space=sflag, size = 0x4, scoped, tag = 'scoped memory for tpu_custom_call.1']
    #allocation4 [shape = 'u8[16384]{0}', space=vmem, size = 0x4000, scoped, tag = 'input window, operand 5, single buffered']
    #allocation5 [shape = 's32[1]{0}', space=sflag, size = 0x4, scoped, tag = 'scoped memory for tpu_custom_call.1']
    %14 = vsyncpa [#allocation3], 0
    %15 = vsyncpa [#allocation5], 0
    // Predicated region
    $region2: #{tpu_custom_call.1} parent=1 // pred_check
      _
    $region3: #{tpu_custom_call.1} parent=1 // pred_check_branch
      %17 = sbr.rel (0) target = $region5
    $region4: #{tpu_custom_call.1} parent=1 // pred_region
      _
    $region5: #{tpu_custom_call.1} parent=1 // pred_fallthru
      _
    // Predicated region
    $region6: #{tpu_custom_call.1} parent=1 // pred_check
      _
    $region7: #{tpu_custom_call.1} parent=1 // pred_check_branch
      %19 = sbr.rel (0) target = $region9
    $region8: #{tpu_custom_call.1} parent=1 // pred_region
      %s21 = ssub.s32 256, 256
      %22 = vsyncadd [#allocation3], %s21
      %s23 = sshll.u32 [#allocation2], 4
      %s24 = int_to_ptr.vmem [resolvable:$true] %s23
      %29 = dma.hbm_to_vmem [thread:$0]  %s1, 256, %s24, [#allocation3], 128, 128, 8
    $region9: #{tpu_custom_call.1} parent=1 // pred_fallthru
      _
    // Predicated region
    $region10: #{tpu_custom_call.1} parent=1 // pred_check
      _
    $region11: #{tpu_custom_call.1} parent=1 // pred_check_branch
      %31 = sbr.rel (0) target = $region13
    $region12: #{tpu_custom_call.1} parent=1 // pred_region
      _
    $region13: #{tpu_custom_call.1} parent=1 // pred_fallthru
      _
    // Predicated region
    $region14: #{tpu_custom_call.1} parent=1 // pred_check
      _
    $region15: #{tpu_custom_call.1} parent=1 // pred_check_branch
      %33 = sbr.rel (0) target = $region17
    $region16: #{tpu_custom_call.1} parent=1 // pred_region
      _
    $region17: #{tpu_custom_call.1} parent=1 // pred_fallthru
      _
    // Predicated region
    $region18: #{tpu_custom_call.1} parent=1 // pred_check
      _
    $region19: #{tpu_custom_call.1} parent=1 // pred_check_branch
      %35 = sbr.rel (0) target = $region21
    $region20: #{tpu_custom_call.1} parent=1 // pred_region
      _
    $region21: #{tpu_custom_call.1} parent=1 // pred_fallthru
      _
    // Predicated region
    $region22: #{tpu_custom_call.1} parent=1 // pred_check
      _
    $region23: #{tpu_custom_call.1} parent=1 // pred_check_branch
      %37 = sbr.rel (0) target = $region25
    $region24: #{tpu_custom_call.1} parent=1 // pred_region
      %s39 = ssub.s32 512, 512
      %40 = vsyncadd [#allocation5], %s39
      %s41 = sshll.u32 [#allocation4], 4
      %s42 = int_to_ptr.vmem [resolvable:$true] %s41
      %47 = dma.hbm_to_vmem [thread:$0]  %s5, 512, %s42, [#allocation5], 128, 128, 8
    $region25: #{tpu_custom_call.1} parent=1 // pred_fallthru
      _
    // Predicated region
    $region26: #{tpu_custom_call.1} parent=1 // pred_check
      _
    $region27: #{tpu_custom_call.1} parent=1 // pred_check_branch
      %49 = sbr.rel (0) target = $region29
    $region28: #{tpu_custom_call.1} parent=1 // pred_region
      _
    $region29: #{tpu_custom_call.1} parent=1 // pred_fallthru
      _
    // Predicated region
    $region30: #{tpu_custom_call.1} parent=1 // pred_check
      _
    $region31: #{tpu_custom_call.1} parent=1 // pred_check_branch
      %51 = sbr.rel (0) target = $region33
    $region32: #{tpu_custom_call.1} parent=1 // pred_region
      _
    $region33: #{tpu_custom_call.1} parent=1 // pred_fallthru
      _
    // Predicated region
    $region34: #{tpu_custom_call.1} parent=1 // pred_check
      _
    $region35: #{tpu_custom_call.1} parent=1 // pred_check_branch
      %53 = sbr.rel (0) target = $region37
    $region36: #{tpu_custom_call.1} parent=1 // pred_region
      _
    $region37: #{tpu_custom_call.1} parent=1 // pred_fallthru
      _
    // Predicated region
    $region38: #{tpu_custom_call.1} parent=1 // pred_check
      _
    $region39: #{tpu_custom_call.1} parent=1 // pred_check_branch
      %55 = sbr.rel (0) target = $region41
    $region40: #{tpu_custom_call.1} parent=1 // pred_region
      %56 = dma.done [#allocation3], 256
    $region41: #{tpu_custom_call.1} parent=1 // pred_fallthru
      _
    // Predicated region
    $region42: #{tpu_custom_call.1} parent=1 // pred_check
      _
    $region43: #{tpu_custom_call.1} parent=1 // pred_check_branch
      %58 = sbr.rel (0) target = $region45
    $region44: #{tpu_custom_call.1} parent=1 // pred_region
      %59 = dma.done [#allocation5], 512
    $region45: #{tpu_custom_call.1} parent=1 // pred_fallthru
      _
    %v60 = vld [vmem:[%s0] sm:$0xff]
    %v61 = vld [vmem:[#allocation2] sm:$0xff]
    %v62 = vld [vmem:[#allocation2 + $0x8] sm:$0xff]
    %v63 = vld [vmem:[%s2] sm:$0x1]
    %v65 = vlaneseq
    %v66 = vshrl.u32 %v65, 7
    %v67 = vsub.s32 0, %v66
    %v68 = vrot.slane %v63, %v67
    %vm70 = vcmask 130048
    %v72 = vsel %vm70, %v60, 0
    %74 = vmatprep.subr.mxu0 0.0
    %v75 = vand.u32 %v61, 4294901760
    %76 = vmatpush1.msra.mxu0 %v75
    %77 = vmatprep.subr.mxu0 0.0
    %v78 = vand.u32 %v62, 4294901760
    %79 = vmatpush1.msra.mxu0 %v78
    %80 = vmatprep.subr.mxu0 0.0
    %81 = vmatpush1.msra.mxu0 0.0
    %82 = vmatprep.subr.mxu0 0.0
    %83 = vmatpush1.msra.mxu0 0.0
    %84 = vmatprep.subr.mxu0 0.0
    %85 = vmatpush1.msra.mxu0 0.0
    %86 = vmatprep.subr.mxu0 0.0
    %87 = vmatpush1.msra.mxu0 0.0
    %88 = vmatprep.subr.mxu0 0.0
    %89 = vmatpush1.msra.mxu0 0.0
    %90 = vmatprep.subr.mxu0 0.0
    %91 = vmatpush1.msra.mxu0 0.0
    %92 = vmatprep.subr.mxu0 0.0
    %93 = vmatpush1.msra.mxu0 0.0
    %94 = vmatprep.subr.mxu0 0.0
    %95 = vmatpush1.msra.mxu0 0.0
    %96 = vmatprep.subr.mxu0 0.0
    %97 = vmatpush1.msra.mxu0 0.0
    %98 = vmatprep.subr.mxu0 0.0
    %99 = vmatpush1.msra.mxu0 0.0
    %100 = vmatprep.subr.mxu0 0.0
    %101 = vmatpush1.msra.mxu0 0.0
    %102 = vmatprep.subr.mxu0 0.0
    %103 = vmatpush1.msra.mxu0 0.0
    %104 = vmatprep.subr.mxu0 0.0
    %105 = vmatpush1.msra.mxu0 0.0
    %106 = vmatprep.subr.mxu0 0.0
    %107 = vmatpush1.msra.mxu0 0.0
    %108 = vmatprep.subr.mxu0 0.0
    %109 = vmatpush1.msra.mxu0 0.0
    %110 = vmatprep.subr.mxu0 0.0
    %111 = vmatpush1.msra.mxu0 0.0
    %112 = vmatprep.subr.mxu0 0.0
    %113 = vmatpush1.msra.mxu0 0.0
    %114 = vmatprep.subr.mxu0 0.0
    %115 = vmatpush1.msra.mxu0 0.0
    %116 = vmatprep.subr.mxu0 0.0
    %117 = vmatpush1.msra.mxu0 0.0
    %118 = vmatprep.subr.mxu0 0.0
    %119 = vmatpush1.msra.mxu0 0.0
    %120 = vmatprep.subr.mxu0 0.0
    %121 = vmatpush1.msra.mxu0 0.0
    %122 = vmatprep.subr.mxu0 0.0
    %123 = vmatpush1.msra.mxu0 0.0
    %124 = vmatprep.subr.mxu0 0.0
    %125 = vmatpush1.msra.mxu0 0.0
    %126 = vmatprep.subr.mxu0 0.0
    %127 = vmatpush1.msra.mxu0 0.0
    %128 = vmatprep.subr.mxu0 0.0
    %129 = vmatpush1.msra.mxu0 0.0
    %130 = vmatprep.subr.mxu0 0.0
    %131 = vmatpush1.msra.mxu0 0.0
    %132 = vmatprep.subr.mxu0 0.0
    %133 = vmatpush1.msra.mxu0 0.0
    %134 = vmatprep.subr.mxu0 0.0
    %135 = vmatpush1.msra.mxu0 0.0
    %136 = vmatprep.subr.mxu0 0.0
    %137 = vmatpush1.msra.mxu0 0.0
    %138 = vmatprep.subr.mxu0 0.0
    %139 = vmatpush1.msra.mxu0 0.0
    %140 = vmatprep.mubr.f32.mxu0 0.0
    %v141 = vand.u32 %v72, 4294901760
    %v142 = vsub.f32 %v72, %v141
    %v143 = vand.u32 %v142, 4294901760
    %v144 = vsub.f32 %v142, %v143
    %v145 = vand.u32 %v144, 4294901760
    %146 = vmatmul.mubr.f32.gmra.mrb[0].mxu0 %v145
    %v147 = vpop.f32.mrb[0].mxu0
    %v148 = vadd.f32 %v68, %v147
    %v149 = vpop.f32.mrb[0].mxu0
    %150 = vdwg.mxu0
    %151 = vmatprep.subr.mxu0 0.0
    %v152 = vand.u32 %v61, 4294901760
    %v153 = vsub.f32 %v61, %v152
    %v154 = vand.u32 %v153, 4294901760
    %v155 = vsub.f32 %v153, %v154
    %v156 = vand.u32 %v155, 4294901760
    %157 = vmatpush1.msra.mxu0 %v156
    %158 = vmatprep.subr.mxu0 0.0
    %v159 = vand.u32 %v62, 4294901760
    %v160 = vsub.f32 %v62, %v159
    %v161 = vand.u32 %v160, 4294901760
    %v162 = vsub.f32 %v160, %v161
    %v163 = vand.u32 %v162, 4294901760
    %164 = vmatpush1.msra.mxu0 %v163
    %165 = vmatprep.subr.mxu0 0.0
    %166 = vmatpush1.msra.mxu0 0.0
    %167 = vmatprep.subr.mxu0 0.0
    %168 = vmatpush1.msra.mxu0 0.0
    %169 = vmatprep.subr.mxu0 0.0
    %170 = vmatpush1.msra.mxu0 0.0
    %171 = vmatprep.subr.mxu0 0.0
    %172 = vmatpush1.msra.mxu0 0.0
    %173 = vmatprep.subr.mxu0 0.0
    %174 = vmatpush1.msra.mxu0 0.0
    %175 = vmatprep.subr.mxu0 0.0
    %176 = vmatpush1.msra.mxu0 0.0
    %177 = vmatprep.subr.mxu0 0.0
    %178 = vmatpush1.msra.mxu0 0.0
    %179 = vmatprep.subr.mxu0 0.0
    %180 = vmatpush1.msra.mxu0 0.0
    %181 = vmatprep.subr.mxu0 0.0
    %182 = vmatpush1.msra.mxu0 0.0
    %183 = vmatprep.subr.mxu0 0.0
    %184 = vmatpush1.msra.mxu0 0.0
    %185 = vmatprep.subr.mxu0 0.0
    %186 = vmatpush1.msra.mxu0 0.0
    %187 = vmatprep.subr.mxu0 0.0
    %188 = vmatpush1.msra.mxu0 0.0
    %189 = vmatprep.subr.mxu0 0.0
    %190 = vmatpush1.msra.mxu0 0.0
    %191 = vmatprep.subr.mxu0 0.0
    %192 = vmatpush1.msra.mxu0 0.0
    %193 = vmatprep.subr.mxu0 0.0
    %194 = vmatpush1.msra.mxu0 0.0
    %195 = vmatprep.subr.mxu0 0.0
    %196 = vmatpush1.msra.mxu0 0.0
    %197 = vmatprep.subr.mxu0 0.0
    %198 = vmatpush1.msra.mxu0 0.0
    %199 = vmatprep.subr.mxu0 0.0
    %200 = vmatpush1.msra.mxu0 0.0
    %201 = vmatprep.subr.mxu0 0.0
    %202 = vmatpush1.msra.mxu0 0.0
    %203 = vmatprep.subr.mxu0 0.0
    %204 = vmatpush1.msra.mxu0 0.0
    %205 = vmatprep.subr.mxu0 0.0
    %206 = vmatpush1.msra.mxu0 0.0
    %207 = vmatprep.subr.mxu0 0.0
    %208 = vmatpush1.msra.mxu0 0.0
    %209 = vmatprep.subr.mxu0 0.0
    %210 = vmatpush1.msra.mxu0 0.0
    %211 = vmatprep.subr.mxu0 0.0
    %212 = vmatpush1.msra.mxu0 0.0
    %213 = vmatprep.subr.mxu0 0.0
    %214 = vmatpush1.msra.mxu0 0.0
    %215 = vmatprep.subr.mxu0 0.0
    %216 = vmatpush1.msra.mxu0 0.0
    %217 = vmatprep.subr.mxu0 0.0
    %218 = vmatpush1.msra.mxu0 0.0
    %219 = vmatprep.subr.mxu0 0.0
    %220 = vmatpush1.msra.mxu0 0.0
    %221 = vmatprep.subr.mxu0 0.0
    %222 = vmatpush1.msra.mxu0 0.0
    %223 = vmatprep.subr.mxu0 0.0
    %224 = vmatpush1.msra.mxu0 0.0
    %225 = vmatprep.mubr.f32.mxu0 0.0
    %v226 = vand.u32 %v72, 4294901760
    %227 = vmatmul.mubr.f32.gmra.mrb[0].mxu0 %v226
    %v228 = vpop.f32.mrb[0].mxu0
    %v229 = vadd.f32 %v148, %v228
    %v230 = vpop.f32.mrb[0].mxu0
    %231 = vdwg.mxu0
    %232 = vmatprep.subr.mxu0 0.0
    %v233 = vand.u32 %v61, 4294901760
    %v234 = vsub.f32 %v61, %v233
    %235 = vmatpush1.msra.mxu0 %v234
    %236 = vmatprep.subr.mxu0 0.0
    %v237 = vand.u32 %v62, 4294901760
    %v238 = vsub.f32 %v62, %v237
    %239 = vmatpush1.msra.mxu0 %v238
    %240 = vmatprep.subr.mxu0 0.0
    %241 = vmatpush1.msra.mxu0 0.0
    %242 = vmatprep.subr.mxu0 0.0
    %243 = vmatpush1.msra.mxu0 0.0
    %244 = vmatprep.subr.mxu0 0.0
    %245 = vmatpush1.msra.mxu0 0.0
    %246 = vmatprep.subr.mxu0 0.0
    %247 = vmatpush1.msra.mxu0 0.0
    %248 = vmatprep.subr.mxu0 0.0
    %249 = vmatpush1.msra.mxu0 0.0
    %250 = vmatprep.subr.mxu0 0.0
    %251 = vmatpush1.msra.mxu0 0.0
    %252 = vmatprep.subr.mxu0 0.0
    %253 = vmatpush1.msra.mxu0 0.0
    %254 = vmatprep.subr.mxu0 0.0
    %255 = vmatpush1.msra.mxu0 0.0
    %256 = vmatprep.subr.mxu0 0.0
    %257 = vmatpush1.msra.mxu0 0.0
    %258 = vmatprep.subr.mxu0 0.0
    %259 = vmatpush1.msra.mxu0 0.0
    %260 = vmatprep.subr.mxu0 0.0
    %261 = vmatpush1.msra.mxu0 0.0
    %262 = vmatprep.subr.mxu0 0.0
    %263 = vmatpush1.msra.mxu0 0.0
    %264 = vmatprep.subr.mxu0 0.0
    %265 = vmatpush1.msra.mxu0 0.0
    %266 = vmatprep.subr.mxu0 0.0
    %267 = vmatpush1.msra.mxu0 0.0
    %268 = vmatprep.subr.mxu0 0.0
    %269 = vmatpush1.msra.mxu0 0.0
    %270 = vmatprep.subr.mxu0 0.0
    %271 = vmatpush1.msra.mxu0 0.0
    %272 = vmatprep.subr.mxu0 0.0
    %273 = vmatpush1.msra.mxu0 0.0
    %274 = vmatprep.subr.mxu0 0.0
    %275 = vmatpush1.msra.mxu0 0.0
    %276 = vmatprep.subr.mxu0 0.0
    %277 = vmatpush1.msra.mxu0 0.0
    %278 = vmatprep.subr.mxu0 0.0
    %279 = vmatpush1.msra.mxu0 0.0
    %280 = vmatprep.subr.mxu0 0.0
    %281 = vmatpush1.msra.mxu0 0.0
    %282 = vmatprep.subr.mxu0 0.0
    %283 = vmatpush1.msra.mxu0 0.0
    %284 = vmatprep.subr.mxu0 0.0
    %285 = vmatpush1.msra.mxu0 0.0
    %286 = vmatprep.subr.mxu0 0.0
    %287 = vmatpush1.msra.mxu0 0.0
    %288 = vmatprep.subr.mxu0 0.0
    %289 = vmatpush1.msra.mxu0 0.0
    %290 = vmatprep.subr.mxu0 0.0
    %291 = vmatpush1.msra.mxu0 0.0
    %292 = vmatprep.subr.mxu0 0.0
    %293 = vmatpush1.msra.mxu0 0.0
    %294 = vmatprep.subr.mxu0 0.0
    %295 = vmatpush1.msra.mxu0 0.0
    %296 = vmatprep.subr.mxu0 0.0
    %297 = vmatpush1.msra.mxu0 0.0
    %298 = vmatprep.subr.mxu0 0.0
    %299 = vmatpush1.msra.mxu0 0.0
    %300 = vmatprep.mubr.f32.mxu0 0.0
    %v301 = vand.u32 %v72, 4294901760
    %v302 = vsub.f32 %v72, %v301
    %303 = vmatmul.mubr.f32.gmra.mrb[0].mxu0 %v302
    %v304 = vpop.f32.mrb[0].mxu0
    %v305 = vadd.f32 %v229, %v304
    %v306 = vpop.f32.mrb[0].mxu0
    %307 = vdwg.mxu0
    %308 = vmatprep.subr.mxu0 0.0
    %v309 = vand.u32 %v61, 4294901760
    %310 = vmatpush1.msra.mxu0 %v309
    %311 = vmatprep.subr.mxu0 0.0
    %v312 = vand.u32 %v62, 4294901760
    %313 = vmatpush1.msra.mxu0 %v312
    %314 = vmatprep.subr.mxu0 0.0
    %315 = vmatpush1.msra.mxu0 0.0
    %316 = vmatprep.subr.mxu0 0.0
    %317 = vmatpush1.msra.mxu0 0.0
    %318 = vmatprep.subr.mxu0 0.0
    %319 = vmatpush1.msra.mxu0 0.0
    %320 = vmatprep.subr.mxu0 0.0
    %321 = vmatpush1.msra.mxu0 0.0
    %322 = vmatprep.subr.mxu0 0.0
    %323 = vmatpush1.msra.mxu0 0.0
    %324 = vmatprep.subr.mxu0 0.0
    %325 = vmatpush1.msra.mxu0 0.0
    %326 = vmatprep.subr.mxu0 0.0
    %327 = vmatpush1.msra.mxu0 0.0
    %328 = vmatprep.subr.mxu0 0.0
    %329 = vmatpush1.msra.mxu0 0.0
    %330 = vmatprep.subr.mxu0 0.0
    %331 = vmatpush1.msra.mxu0 0.0
    %332 = vmatprep.subr.mxu0 0.0
    %333 = vmatpush1.msra.mxu0 0.0
    %334 = vmatprep.subr.mxu0 0.0
    %335 = vmatpush1.msra.mxu0 0.0
    %336 = vmatprep.subr.mxu0 0.0
    %337 = vmatpush1.msra.mxu0 0.0
    %338 = vmatprep.subr.mxu0 0.0
    %339 = vmatpush1.msra.mxu0 0.0
    %340 = vmatprep.subr.mxu0 0.0
    %341 = vmatpush1.msra.mxu0 0.0
    %342 = vmatprep.subr.mxu0 0.0
    %343 = vmatpush1.msra.mxu0 0.0
    %344 = vmatprep.subr.mxu0 0.0
    %345 = vmatpush1.msra.mxu0 0.0
    %346 = vmatprep.subr.mxu0 0.0
    %347 = vmatpush1.msra.mxu0 0.0
    %348 = vmatprep.subr.mxu0 0.0
    %349 = vmatpush1.msra.mxu0 0.0
    %350 = vmatprep.subr.mxu0 0.0
    %351 = vmatpush1.msra.mxu0 0.0
    %352 = vmatprep.subr.mxu0 0.0
    %353 = vmatpush1.msra.mxu0 0.0
    %354 = vmatprep.subr.mxu0 0.0
    %355 = vmatpush1.msra.mxu0 0.0
    %356 = vmatprep.subr.mxu0 0.0
    %357 = vmatpush1.msra.mxu0 0.0
    %358 = vmatprep.subr.mxu0 0.0
    %359 = vmatpush1.msra.mxu0 0.0
    %360 = vmatprep.subr.mxu0 0.0
    %361 = vmatpush1.msra.mxu0 0.0
    %362 = vmatprep.subr.mxu0 0.0
    %363 = vmatpush1.msra.mxu0 0.0
    %364 = vmatprep.subr.mxu0 0.0
    %365 = vmatpush1.msra.mxu0 0.0
    %366 = vmatprep.subr.mxu0 0.0
    %367 = vmatpush1.msra.mxu0 0.0
    %368 = vmatprep.subr.mxu0 0.0
    %369 = vmatpush1.msra.mxu0 0.0
    %370 = vmatprep.subr.mxu0 0.0
    %371 = vmatpush1.msra.mxu0 0.0
    %372 = vmatprep.subr.mxu0 0.0
    %373 = vmatpush1.msra.mxu0 0.0
    %374 = vmatprep.mubr.f32.mxu0 0.0
    %v375 = vand.u32 %v72, 4294901760
    %v376 = vsub.f32 %v72, %v375
    %v377 = vand.u32 %v376, 4294901760
    %378 = vmatmul.mubr.f32.gmra.mrb[0].mxu0 %v377
    %v379 = vpop.f32.mrb[0].mxu0
    %v380 = vadd.f32 %v305, %v379
    %v381 = vpop.f32.mrb[0].mxu0
    %382 = vdwg.mxu0
    %383 = vmatprep.subr.mxu0 0.0
    %v384 = vand.u32 %v61, 4294901760
    %v385 = vsub.f32 %v61, %v384
    %v386 = vand.u32 %v385, 4294901760
    %387 = vmatpush1.msra.mxu0 %v386
    %388 = vmatprep.subr.mxu0 0.0
    %v389 = vand.u32 %v62, 4294901760
    %v390 = vsub.f32 %v62, %v389
    %v391 = vand.u32 %v390, 4294901760
    %392 = vmatpush1.msra.mxu0 %v391
    %393 = vmatprep.subr.mxu0 0.0
    %394 = vmatpush1.msra.mxu0 0.0
    %395 = vmatprep.subr.mxu0 0.0
    %396 = vmatpush1.msra.mxu0 0.0
    %397 = vmatprep.subr.mxu0 0.0
    %398 = vmatpush1.msra.mxu0 0.0
    %399 = vmatprep.subr.mxu0 0.0
    %400 = vmatpush1.msra.mxu0 0.0
    %401 = vmatprep.subr.mxu0 0.0
    %402 = vmatpush1.msra.mxu0 0.0
    %403 = vmatprep.subr.mxu0 0.0
    %404 = vmatpush1.msra.mxu0 0.0
    %405 = vmatprep.subr.mxu0 0.0
    %406 = vmatpush1.msra.mxu0 0.0
    %407 = vmatprep.subr.mxu0 0.0
    %408 = vmatpush1.msra.mxu0 0.0
    %409 = vmatprep.subr.mxu0 0.0
    %410 = vmatpush1.msra.mxu0 0.0
    %411 = vmatprep.subr.mxu0 0.0
    %412 = vmatpush1.msra.mxu0 0.0
    %413 = vmatprep.subr.mxu0 0.0
    %414 = vmatpush1.msra.mxu0 0.0
    %415 = vmatprep.subr.mxu0 0.0
    %416 = vmatpush1.msra.mxu0 0.0
    %417 = vmatprep.subr.mxu0 0.0
    %418 = vmatpush1.msra.mxu0 0.0
    %419 = vmatprep.subr.mxu0 0.0
    %420 = vmatpush1.msra.mxu0 0.0
    %421 = vmatprep.subr.mxu0 0.0
    %422 = vmatpush1.msra.mxu0 0.0
    %423 = vmatprep.subr.mxu0 0.0
    %424 = vmatpush1.msra.mxu0 0.0
    %425 = vmatprep.subr.mxu0 0.0
    %426 = vmatpush1.msra.mxu0 0.0
    %427 = vmatprep.subr.mxu0 0.0
    %428 = vmatpush1.msra.mxu0 0.0
    %429 = vmatprep.subr.mxu0 0.0
    %430 = vmatpush1.msra.mxu0 0.0
    %431 = vmatprep.subr.mxu0 0.0
    %432 = vmatpush1.msra.mxu0 0.0
    %433 = vmatprep.subr.mxu0 0.0
    %434 = vmatpush1.msra.mxu0 0.0
    %435 = vmatprep.subr.mxu0 0.0
    %436 = vmatpush1.msra.mxu0 0.0
    %437 = vmatprep.subr.mxu0 0.0
    %438 = vmatpush1.msra.mxu0 0.0
    %439 = vmatprep.subr.mxu0 0.0
    %440 = vmatpush1.msra.mxu0 0.0
    %441 = vmatprep.subr.mxu0 0.0
    %442 = vmatpush1.msra.mxu0 0.0
    %443 = vmatprep.subr.mxu0 0.0
    %444 = vmatpush1.msra.mxu0 0.0
    %445 = vmatprep.subr.mxu0 0.0
    %446 = vmatpush1.msra.mxu0 0.0
    %447 = vmatprep.subr.mxu0 0.0
    %448 = vmatpush1.msra.mxu0 0.0
    %449 = vmatprep.subr.mxu0 0.0
    %450 = vmatpush1.msra.mxu0 0.0
    %451 = vmatprep.subr.mxu0 0.0
    %452 = vmatpush1.msra.mxu0 0.0
    %453 = vmatprep.mubr.f32.mxu0 0.0
    %v454 = vand.u32 %v72, 4294901760
    %455 = vmatmul.mubr.f32.gmra.mrb[0].mxu0 %v454
    %v456 = vpop.f32.mrb[0].mxu0
    %v457 = vadd.f32 %v380, %v456
    %v458 = vpop.f32.mrb[0].mxu0
    %459 = vdwg.mxu0
    %460 = vmatprep.subr.mxu0 0.0
    %v461 = vand.u32 %v61, 4294901760
    %462 = vmatpush1.msra.mxu0 %v461
    %463 = vmatprep.subr.mxu0 0.0
    %v464 = vand.u32 %v62, 4294901760
    %465 = vmatpush1.msra.mxu0 %v464
    %466 = vmatprep.subr.mxu0 0.0
    %467 = vmatpush1.msra.mxu0 0.0
    %468 = vmatprep.subr.mxu0 0.0
    %469 = vmatpush1.msra.mxu0 0.0
    %470 = vmatprep.subr.mxu0 0.0
    %471 = vmatpush1.msra.mxu0 0.0
    %472 = vmatprep.subr.mxu0 0.0
    %473 = vmatpush1.msra.mxu0 0.0
    %474 = vmatprep.subr.mxu0 0.0
    %475 = vmatpush1.msra.mxu0 0.0
    %476 = vmatprep.subr.mxu0 0.0
    %477 = vmatpush1.msra.mxu0 0.0
    %478 = vmatprep.subr.mxu0 0.0
    %479 = vmatpush1.msra.mxu0 0.0
    %480 = vmatprep.subr.mxu0 0.0
    %481 = vmatpush1.msra.mxu0 0.0
    %482 = vmatprep.subr.mxu0 0.0
    %483 = vmatpush1.msra.mxu0 0.0
    %484 = vmatprep.subr.mxu0 0.0
    %485 = vmatpush1.msra.mxu0 0.0
    %486 = vmatprep.subr.mxu0 0.0
    %487 = vmatpush1.msra.mxu0 0.0
    %488 = vmatprep.subr.mxu0 0.0
    %489 = vmatpush1.msra.mxu0 0.0
    %490 = vmatprep.subr.mxu0 0.0
    %491 = vmatpush1.msra.mxu0 0.0
    %492 = vmatprep.subr.mxu0 0.0
    %493 = vmatpush1.msra.mxu0 0.0
    %494 = vmatprep.subr.mxu0 0.0
    %495 = vmatpush1.msra.mxu0 0.0
    %496 = vmatprep.subr.mxu0 0.0
    %497 = vmatpush1.msra.mxu0 0.0
    %498 = vmatprep.subr.mxu0 0.0
    %499 = vmatpush1.msra.mxu0 0.0
    %500 = vmatprep.subr.mxu0 0.0
    %501 = vmatpush1.msra.mxu0 0.0
    %502 = vmatprep.subr.mxu0 0.0
    %503 = vmatpush1.msra.mxu0 0.0
    %504 = vmatprep.subr.mxu0 0.0
    %505 = vmatpush1.msra.mxu0 0.0
    %506 = vmatprep.subr.mxu0 0.0
    %507 = vmatpush1.msra.mxu0 0.0
    %508 = vmatprep.subr.mxu0 0.0
    %509 = vmatpush1.msra.mxu0 0.0
    %510 = vmatprep.subr.mxu0 0.0
    %511 = vmatpush1.msra.mxu0 0.0
    %512 = vmatprep.subr.mxu0 0.0
    %513 = vmatpush1.msra.mxu0 0.0
    %514 = vmatprep.subr.mxu0 0.0
    %515 = vmatpush1.msra.mxu0 0.0
    %516 = vmatprep.subr.mxu0 0.0
    %517 = vmatpush1.msra.mxu0 0.0
    %518 = vmatprep.subr.mxu0 0.0
    %519 = vmatpush1.msra.mxu0 0.0
    %520 = vmatprep.subr.mxu0 0.0
    %521 = vmatpush1.msra.mxu0 0.0
    %522 = vmatprep.subr.mxu0 0.0
    %523 = vmatpush1.msra.mxu0 0.0
    %524 = vmatprep.subr.mxu0 0.0
    %525 = vmatpush1.msra.mxu0 0.0
    %526 = vmatprep.mubr.f32.mxu0 0.0
    %v527 = vand.u32 %v72, 4294901760
    %528 = vmatmul.mubr.f32.gmra.mrb[0].mxu0 %v527
    %v529 = vpop.f32.mrb[0].mxu0
    %v530 = vadd.f32 %v457, %v529
    %v531 = vpop.f32.mrb[0].mxu0
    %532 = vdwg.mxu0
    %v533 = vmul.f32 %v530, 0.51
    %v534 = vmul.f32 %v530, %v530
    %v535 = vadd.f32 %v534, 1.4210855e-14
    %v536 = vrsqrt.pop %v535
    %v537 = vmul.f32 %v535, %v536
    %vm538 = vcmp.eq.f32.partialorder %v535, inf
    %v539 = vsel %vm538, %v535, %v537
    %vm540 = vcmp.eq.f32.partialorder %v535, 0.0
    %v541 = vand.u32 %v535, 2147483648
    %v542 = vsel %vm540, %v541, %v539
    %v543 = vmul.f32 %v542, 0.49
    %v544 = vadd.f32 %v533, %v543
    %v545 = vsub.f32 %v544, 5.8412553e-08
    %v546 = vld [vmem:[%s3] sm:$0xff]
    %v547 = vld [vmem:[%s3 + $0x8] sm:$0xff]
    %v548 = vld [vmem:[%s3 + $0x10] sm:$0xff]
    %v549 = vld [vmem:[%s3 + $0x18] sm:$0xff]
    %v550 = vld [vmem:[%s4] sm:$0x1]
    %v552 = vlaneseq
    %v553 = vshrl.u32 %v552, 7
    %v554 = vsub.s32 0, %v553
    %v555 = vrot.slane %v550, %v554
    %vm557 = vcmask 261120
    %v559 = vsel %vm557, %v545, 0
    %561 = vmatprep.subr.mxu0 0.0
    %v562 = vand.u32 %v546, 4294901760
    %563 = vmatpush1.msra.mxu0 %v562
    %564 = vmatprep.subr.mxu0 0.0
    %v565 = vand.u32 %v547, 4294901760
    %566 = vmatpush1.msra.mxu0 %v565
    %567 = vmatprep.subr.mxu0 0.0
    %v568 = vand.u32 %v548, 4294901760
    %569 = vmatpush1.msra.mxu0 %v568
    %570 = vmatprep.subr.mxu0 0.0
    %v571 = vand.u32 %v549, 4294901760
    %572 = vmatpush1.msra.mxu0 %v571
    %573 = vmatprep.subr.mxu0 0.0
    %574 = vmatpush1.msra.mxu0 0.0
    %575 = vmatprep.subr.mxu0 0.0
    %576 = vmatpush1.msra.mxu0 0.0
    %577 = vmatprep.subr.mxu0 0.0
    %578 = vmatpush1.msra.mxu0 0.0
    %579 = vmatprep.subr.mxu0 0.0
    %580 = vmatpush1.msra.mxu0 0.0
    %581 = vmatprep.subr.mxu0 0.0
    %582 = vmatpush1.msra.mxu0 0.0
    %583 = vmatprep.subr.mxu0 0.0
    %584 = vmatpush1.msra.mxu0 0.0
    %585 = vmatprep.subr.mxu0 0.0
    %586 = vmatpush1.msra.mxu0 0.0
    %587 = vmatprep.subr.mxu0 0.0
    %588 = vmatpush1.msra.mxu0 0.0
    %589 = vmatprep.subr.mxu0 0.0
    %590 = vmatpush1.msra.mxu0 0.0
    %591 = vmatprep.subr.mxu0 0.0
    %592 = vmatpush1.msra.mxu0 0.0
    %593 = vmatprep.subr.mxu0 0.0
    %594 = vmatpush1.msra.mxu0 0.0
    %595 = vmatprep.subr.mxu0 0.0
    %596 = vmatpush1.msra.mxu0 0.0
    %597 = vmatprep.subr.mxu0 0.0
    %598 = vmatpush1.msra.mxu0 0.0
    %599 = vmatprep.subr.mxu0 0.0
    %600 = vmatpush1.msra.mxu0 0.0
    %601 = vmatprep.subr.mxu0 0.0
    %602 = vmatpush1.msra.mxu0 0.0
    %603 = vmatprep.subr.mxu0 0.0
    %604 = vmatpush1.msra.mxu0 0.0
    %605 = vmatprep.subr.mxu0 0.0
    %606 = vmatpush1.msra.mxu0 0.0
    %607 = vmatprep.subr.mxu0 0.0
    %608 = vmatpush1.msra.mxu0 0.0
    %609 = vmatprep.subr.mxu0 0.0
    %610 = vmatpush1.msra.mxu0 0.0
    %611 = vmatprep.subr.mxu0 0.0
    %612 = vmatpush1.msra.mxu0 0.0
    %613 = vmatprep.subr.mxu0 0.0
    %614 = vmatpush1.msra.mxu0 0.0
    %615 = vmatprep.subr.mxu0 0.0
    %616 = vmatpush1.msra.mxu0 0.0
    %617 = vmatprep.subr.mxu0 0.0
    %618 = vmatpush1.msra.mxu0 0.0
    %619 = vmatprep.subr.mxu0 0.0
    %620 = vmatpush1.msra.mxu0 0.0
    %621 = vmatprep.subr.mxu0 0.0
    %622 = vmatpush1.msra.mxu0 0.0
    %623 = vmatprep.subr.mxu0 0.0
    %624 = vmatpush1.msra.mxu0 0.0
    %625 = vmatprep.subr.mxu0 0.0
    %626 = vmatpush1.msra.mxu0 0.0
    %627 = vmatprep.subr.mxu0 0.0
    %628 = vmatpush1.msra.mxu0 0.0
    %629 = vmatprep.mubr.f32.mxu0 0.0
    %v630 = vand.u32 %v559, 4294901760
    %v631 = vsub.f32 %v559, %v630
    %v632 = vand.u32 %v631, 4294901760
    %v633 = vsub.f32 %v631, %v632
    %v634 = vand.u32 %v633, 4294901760
    %635 = vmatmul.mubr.f32.gmra.mrb[0].mxu0 %v634
    %v636 = vpop.f32.mrb[0].mxu0
    %v637 = vadd.f32 %v555, %v636
    %v638 = vpop.f32.mrb[0].mxu0
    %639 = vdwg.mxu0
    %640 = vmatprep.subr.mxu0 0.0
    %v641 = vand.u32 %v546, 4294901760
    %v642 = vsub.f32 %v546, %v641
    %v643 = vand.u32 %v642, 4294901760
    %v644 = vsub.f32 %v642, %v643
    %v645 = vand.u32 %v644, 4294901760
    %646 = vmatpush1.msra.mxu0 %v645
    %647 = vmatprep.subr.mxu0 0.0
    %v648 = vand.u32 %v547, 4294901760
    %v649 = vsub.f32 %v547, %v648
    %v650 = vand.u32 %v649, 4294901760
    %v651 = vsub.f32 %v649, %v650
    %v652 = vand.u32 %v651, 4294901760
    %653 = vmatpush1.msra.mxu0 %v652
    %654 = vmatprep.subr.mxu0 0.0
    %v655 = vand.u32 %v548, 4294901760
    %v656 = vsub.f32 %v548, %v655
    %v657 = vand.u32 %v656, 4294901760
    %v658 = vsub.f32 %v656, %v657
    %v659 = vand.u32 %v658, 4294901760
    %660 = vmatpush1.msra.mxu0 %v659
    %661 = vmatprep.subr.mxu0 0.0
    %v662 = vand.u32 %v549, 4294901760
    %v663 = vsub.f32 %v549, %v662
    %v664 = vand.u32 %v663, 4294901760
    %v665 = vsub.f32 %v663, %v664
    %v666 = vand.u32 %v665, 4294901760
    %667 = vmatpush1.msra.mxu0 %v666
    %668 = vmatprep.subr.mxu0 0.0
    %669 = vmatpush1.msra.mxu0 0.0
    %670 = vmatprep.subr.mxu0 0.0
    %671 = vmatpush1.msra.mxu0 0.0
    %672 = vmatprep.subr.mxu0 0.0
    %673 = vmatpush1.msra.mxu0 0.0
    %674 = vmatprep.subr.mxu0 0.0
    %675 = vmatpush1.msra.mxu0 0.0
    %676 = vmatprep.subr.mxu0 0.0
    %677 = vmatpush1.msra.mxu0 0.0
    %678 = vmatprep.subr.mxu0 0.0
    %679 = vmatpush1.msra.mxu0 0.0
    %680 = vmatprep.subr.mxu0 0.0
    %681 = vmatpush1.msra.mxu0 0.0
    %682 = vmatprep.subr.mxu0 0.0
    %683 = vmatpush1.msra.mxu0 0.0
    %684 = vmatprep.subr.mxu0 0.0
    %685 = vmatpush1.msra.mxu0 0.0
    %686 = vmatprep.subr.mxu0 0.0
    %687 = vmatpush1.msra.mxu0 0.0
    %688 = vmatprep.subr.mxu0 0.0
    %689 = vmatpush1.msra.mxu0 0.0
    %690 = vmatprep.subr.mxu0 0.0
    %691 = vmatpush1.msra.mxu0 0.0
    %692 = vmatprep.subr.mxu0 0.0
    %693 = vmatpush1.msra.mxu0 0.0
    %694 = vmatprep.subr.mxu0 0.0
    %695 = vmatpush1.msra.mxu0 0.0
    %696 = vmatprep.subr.mxu0 0.0
    %697 = vmatpush1.msra.mxu0 0.0
    %698 = vmatprep.subr.mxu0 0.0
    %699 = vmatpush1.msra.mxu0 0.0
    %700 = vmatprep.subr.mxu0 0.0
    %701 = vmatpush1.msra.mxu0 0.0
    %702 = vmatprep.subr.mxu0 0.0
    %703 = vmatpush1.msra.mxu0 0.0
    %704 = vmatprep.subr.mxu0 0.0
    %705 = vmatpush1.msra.mxu0 0.0
    %706 = vmatprep.subr.mxu0 0.0
    %707 = vmatpush1.msra.mxu0 0.0
    %708 = vmatprep.subr.mxu0 0.0
    %709 = vmatpush1.msra.mxu0 0.0
    %710 = vmatprep.subr.mxu0 0.0
    %711 = vmatpush1.msra.mxu0 0.0
    %712 = vmatprep.subr.mxu0 0.0
    %713 = vmatpush1.msra.mxu0 0.0
    %714 = vmatprep.subr.mxu0 0.0
    %715 = vmatpush1.msra.mxu0 0.0
    %716 = vmatprep.subr.mxu0 0.0
    %717 = vmatpush1.msra.mxu0 0.0
    %718 = vmatprep.subr.mxu0 0.0
    %719 = vmatpush1.msra.mxu0 0.0
    %720 = vmatprep.subr.mxu0 0.0
    %721 = vmatpush1.msra.mxu0 0.0
    %722 = vmatprep.subr.mxu0 0.0
    %723 = vmatpush1.msra.mxu0 0.0
    %724 = vmatprep.mubr.f32.mxu0 0.0
    %v725 = vand.u32 %v559, 4294901760
    %726 = vmatmul.mubr.f32.gmra.mrb[0].mxu0 %v725
    %v727 = vpop.f32.mrb[0].mxu0
    %v728 = vadd.f32 %v637, %v727
    %v729 = vpop.f32.mrb[0].mxu0
    %730 = vdwg.mxu0
    %731 = vmatprep.subr.mxu0 0.0
    %v732 = vand.u32 %v546, 4294901760
    %v733 = vsub.f32 %v546, %v732
    %734 = vmatpush1.msra.mxu0 %v733
    %735 = vmatprep.subr.mxu0 0.0
    %v736 = vand.u32 %v547, 4294901760
    %v737 = vsub.f32 %v547, %v736
    %738 = vmatpush1.msra.mxu0 %v737
    %739 = vmatprep.subr.mxu0 0.0
    %v740 = vand.u32 %v548, 4294901760
    %v741 = vsub.f32 %v548, %v740
    %742 = vmatpush1.msra.mxu0 %v741
    %743 = vmatprep.subr.mxu0 0.0
    %v744 = vand.u32 %v549, 4294901760
    %v745 = vsub.f32 %v549, %v744
    %746 = vmatpush1.msra.mxu0 %v745
    %747 = vmatprep.subr.mxu0 0.0
    %748 = vmatpush1.msra.mxu0 0.0
    %749 = vmatprep.subr.mxu0 0.0
    %750 = vmatpush1.msra.mxu0 0.0
    %751 = vmatprep.subr.mxu0 0.0
    %752 = vmatpush1.msra.mxu0 0.0
    %753 = vmatprep.subr.mxu0 0.0
    %754 = vmatpush1.msra.mxu0 0.0
    %755 = vmatprep.subr.mxu0 0.0
    %756 = vmatpush1.msra.mxu0 0.0
    %757 = vmatprep.subr.mxu0 0.0
    %758 = vmatpush1.msra.mxu0 0.0
    %759 = vmatprep.subr.mxu0 0.0
    %760 = vmatpush1.msra.mxu0 0.0
    %761 = vmatprep.subr.mxu0 0.0
    %762 = vmatpush1.msra.mxu0 0.0
    %763 = vmatprep.subr.mxu0 0.0
    %764 = vmatpush1.msra.mxu0 0.0
    %765 = vmatprep.subr.mxu0 0.0
    %766 = vmatpush1.msra.mxu0 0.0
    %767 = vmatprep.subr.mxu0 0.0
    %768 = vmatpush1.msra.mxu0 0.0
    %769 = vmatprep.subr.mxu0 0.0
    %770 = vmatpush1.msra.mxu0 0.0
    %771 = vmatprep.subr.mxu0 0.0
    %772 = vmatpush1.msra.mxu0 0.0
    %773 = vmatprep.subr.mxu0 0.0
    %774 = vmatpush1.msra.mxu0 0.0
    %775 = vmatprep.subr.mxu0 0.0
    %776 = vmatpush1.msra.mxu0 0.0
    %777 = vmatprep.subr.mxu0 0.0
    %778 = vmatpush1.msra.mxu0 0.0
    %779 = vmatprep.subr.mxu0 0.0
    %780 = vmatpush1.msra.mxu0 0.0
    %781 = vmatprep.subr.mxu0 0.0
    %782 = vmatpush1.msra.mxu0 0.0
    %783 = vmatprep.subr.mxu0 0.0
    %784 = vmatpush1.msra.mxu0 0.0
    %785 = vmatprep.subr.mxu0 0.0
    %786 = vmatpush1.msra.mxu0 0.0
    %787 = vmatprep.subr.mxu0 0.0
    %788 = vmatpush1.msra.mxu0 0.0
    %789 = vmatprep.subr.mxu0 0.0
    %790 = vmatpush1.msra.mxu0 0.0
    %791 = vmatprep.subr.mxu0 0.0
    %792 = vmatpush1.msra.mxu0 0.0
    %793 = vmatprep.subr.mxu0 0.0
    %794 = vmatpush1.msra.mxu0 0.0
    %795 = vmatprep.subr.mxu0 0.0
    %796 = vmatpush1.msra.mxu0 0.0
    %797 = vmatprep.subr.mxu0 0.0
    %798 = vmatpush1.msra.mxu0 0.0
    %799 = vmatprep.subr.mxu0 0.0
    %800 = vmatpush1.msra.mxu0 0.0
    %801 = vmatprep.subr.mxu0 0.0
    %802 = vmatpush1.msra.mxu0 0.0
    %803 = vmatprep.mubr.f32.mxu0 0.0
    %v804 = vand.u32 %v559, 4294901760
    %v805 = vsub.f32 %v559, %v804
    %806 = vmatmul.mubr.f32.gmra.mrb[0].mxu0 %v805
    %v807 = vpop.f32.mrb[0].mxu0
    %v808 = vadd.f32 %v728, %v807
    %v809 = vpop.f32.mrb[0].mxu0
    %810 = vdwg.mxu0
    %811 = vmatprep.subr.mxu0 0.0
    %v812 = vand.u32 %v546, 4294901760
    %813 = vmatpush1.msra.mxu0 %v812
    %814 = vmatprep.subr.mxu0 0.0
    %v815 = vand.u32 %v547, 4294901760
    %816 = vmatpush1.msra.mxu0 %v815
    %817 = vmatprep.subr.mxu0 0.0
    %v818 = vand.u32 %v548, 4294901760
    %819 = vmatpush1.msra.mxu0 %v818
    %820 = vmatprep.subr.mxu0 0.0
    %v821 = vand.u32 %v549, 4294901760
    %822 = vmatpush1.msra.mxu0 %v821
    %823 = vmatprep.subr.mxu0 0.0
    %824 = vmatpush1.msra.mxu0 0.0
    %825 = vmatprep.subr.mxu0 0.0
    %826 = vmatpush1.msra.mxu0 0.0
    %827 = vmatprep.subr.mxu0 0.0
    %828 = vmatpush1.msra.mxu0 0.0
    %829 = vmatprep.subr.mxu0 0.0
    %830 = vmatpush1.msra.mxu0 0.0
    %831 = vmatprep.subr.mxu0 0.0
    %832 = vmatpush1.msra.mxu0 0.0
    %833 = vmatprep.subr.mxu0 0.0
    %834 = vmatpush1.msra.mxu0 0.0
    %835 = vmatprep.subr.mxu0 0.0
    %836 = vmatpush1.msra.mxu0 0.0
    %837 = vmatprep.subr.mxu0 0.0
    %838 = vmatpush1.msra.mxu0 0.0
    %839 = vmatprep.subr.mxu0 0.0
    %840 = vmatpush1.msra.mxu0 0.0
    %841 = vmatprep.subr.mxu0 0.0
    %842 = vmatpush1.msra.mxu0 0.0
    %843 = vmatprep.subr.mxu0 0.0
    %844 = vmatpush1.msra.mxu0 0.0
    %845 = vmatprep.subr.mxu0 0.0
    %846 = vmatpush1.msra.mxu0 0.0
    %847 = vmatprep.subr.mxu0 0.0
    %848 = vmatpush1.msra.mxu0 0.0
    %849 = vmatprep.subr.mxu0 0.0
    %850 = vmatpush1.msra.mxu0 0.0
    %851 = vmatprep.subr.mxu0 0.0
    %852 = vmatpush1.msra.mxu0 0.0
    %853 = vmatprep.subr.mxu0 0.0
    %854 = vmatpush1.msra.mxu0 0.0
    %855 = vmatprep.subr.mxu0 0.0
    %856 = vmatpush1.msra.mxu0 0.0
    %857 = vmatprep.subr.mxu0 0.0
    %858 = vmatpush1.msra.mxu0 0.0
    %859 = vmatprep.subr.mxu0 0.0
    %860 = vmatpush1.msra.mxu0 0.0
    %861 = vmatprep.subr.mxu0 0.0
    %862 = vmatpush1.msra.mxu0 0.0
    %863 = vmatprep.subr.mxu0 0.0
    %864 = vmatpush1.msra.mxu0 0.0
    %865 = vmatprep.subr.mxu0 0.0
    %866 = vmatpush1.msra.mxu0 0.0
    %867 = vmatprep.subr.mxu0 0.0
    %868 = vmatpush1.msra.mxu0 0.0
    %869 = vmatprep.subr.mxu0 0.0
    %870 = vmatpush1.msra.mxu0 0.0
    %871 = vmatprep.subr.mxu0 0.0
    %872 = vmatpush1.msra.mxu0 0.0
    %873 = vmatprep.subr.mxu0 0.0
    %874 = vmatpush1.msra.mxu0 0.0
    %875 = vmatprep.subr.mxu0 0.0
    %876 = vmatpush1.msra.mxu0 0.0
    %877 = vmatprep.subr.mxu0 0.0
    %878 = vmatpush1.msra.mxu0 0.0
    %879 = vmatprep.mubr.f32.mxu0 0.0
    %v880 = vand.u32 %v559, 4294901760
    %v881 = vsub.f32 %v559, %v880
    %v882 = vand.u32 %v881, 4294901760
    %883 = vmatmul.mubr.f32.gmra.mrb[0].mxu0 %v882
    %v884 = vpop.f32.mrb[0].mxu0
    %v885 = vadd.f32 %v808, %v884
    %v886 = vpop.f32.mrb[0].mxu0
    %887 = vdwg.mxu0
    %888 = vmatprep.subr.mxu0 0.0
    %v889 = vand.u32 %v546, 4294901760
    %v890 = vsub.f32 %v546, %v889
    %v891 = vand.u32 %v890, 4294901760
    %892 = vmatpush1.msra.mxu0 %v891
    %893 = vmatprep.subr.mxu0 0.0
    %v894 = vand.u32 %v547, 4294901760
    %v895 = vsub.f32 %v547, %v894
    %v896 = vand.u32 %v895, 4294901760
    %897 = vmatpush1.msra.mxu0 %v896
    %898 = vmatprep.subr.mxu0 0.0
    %v899 = vand.u32 %v548, 4294901760
    %v900 = vsub.f32 %v548, %v899
    %v901 = vand.u32 %v900, 4294901760
    %902 = vmatpush1.msra.mxu0 %v901
    %903 = vmatprep.subr.mxu0 0.0
    %v904 = vand.u32 %v549, 4294901760
    %v905 = vsub.f32 %v549, %v904
    %v906 = vand.u32 %v905, 4294901760
    %907 = vmatpush1.msra.mxu0 %v906
    %908 = vmatprep.subr.mxu0 0.0
    %909 = vmatpush1.msra.mxu0 0.0
    %910 = vmatprep.subr.mxu0 0.0
    %911 = vmatpush1.msra.mxu0 0.0
    %912 = vmatprep.subr.mxu0 0.0
    %913 = vmatpush1.msra.mxu0 0.0
    %914 = vmatprep.subr.mxu0 0.0
    %915 = vmatpush1.msra.mxu0 0.0
    %916 = vmatprep.subr.mxu0 0.0
    %917 = vmatpush1.msra.mxu0 0.0
    %918 = vmatprep.subr.mxu0 0.0
    %919 = vmatpush1.msra.mxu0 0.0
    %920 = vmatprep.subr.mxu0 0.0
    %921 = vmatpush1.msra.mxu0 0.0
    %922 = vmatprep.subr.mxu0 0.0
    %923 = vmatpush1.msra.mxu0 0.0
    %924 = vmatprep.subr.mxu0 0.0
    %925 = vmatpush1.msra.mxu0 0.0
    %926 = vmatprep.subr.mxu0 0.0
    %927 = vmatpush1.msra.mxu0 0.0
    %928 = vmatprep.subr.mxu0 0.0
    %929 = vmatpush1.msra.mxu0 0.0
    %930 = vmatprep.subr.mxu0 0.0
    %931 = vmatpush1.msra.mxu0 0.0
    %932 = vmatprep.subr.mxu0 0.0
    %933 = vmatpush1.msra.mxu0 0.0
    %934 = vmatprep.subr.mxu0 0.0
    %935 = vmatpush1.msra.mxu0 0.0
    %936 = vmatprep.subr.mxu0 0.0
    %937 = vmatpush1.msra.mxu0 0.0
    %938 = vmatprep.subr.mxu0 0.0
    %939 = vmatpush1.msra.mxu0 0.0
    %940 = vmatprep.subr.mxu0 0.0
    %941 = vmatpush1.msra.mxu0 0.0
    %942 = vmatprep.subr.mxu0 0.0
    %943 = vmatpush1.msra.mxu0 0.0
    %944 = vmatprep.subr.mxu0 0.0
    %945 = vmatpush1.msra.mxu0 0.0
    %946 = vmatprep.subr.mxu0 0.0
    %947 = vmatpush1.msra.mxu0 0.0
    %948 = vmatprep.subr.mxu0 0.0
    %949 = vmatpush1.msra.mxu0 0.0
    %950 = vmatprep.subr.mxu0 0.0
    %951 = vmatpush1.msra.mxu0 0.0
    %952 = vmatprep.subr.mxu0 0.0
    %953 = vmatpush1.msra.mxu0 0.0
    %954 = vmatprep.subr.mxu0 0.0
    %955 = vmatpush1.msra.mxu0 0.0
    %956 = vmatprep.subr.mxu0 0.0
    %957 = vmatpush1.msra.mxu0 0.0
    %958 = vmatprep.subr.mxu0 0.0
    %959 = vmatpush1.msra.mxu0 0.0
    %960 = vmatprep.subr.mxu0 0.0
    %961 = vmatpush1.msra.mxu0 0.0
    %962 = vmatprep.subr.mxu0 0.0
    %963 = vmatpush1.msra.mxu0 0.0
    %964 = vmatprep.mubr.f32.mxu0 0.0
    %v965 = vand.u32 %v559, 4294901760
    %966 = vmatmul.mubr.f32.gmra.mrb[0].mxu0 %v965
    %v967 = vpop.f32.mrb[0].mxu0
    %v968 = vadd.f32 %v885, %v967
    %v969 = vpop.f32.mrb[0].mxu0
    %970 = vdwg.mxu0
    %971 = vmatprep.subr.mxu0 0.0
    %v972 = vand.u32 %v546, 4294901760
    %973 = vmatpush1.msra.mxu0 %v972
    %974 = vmatprep.subr.mxu0 0.0
    %v975 = vand.u32 %v547, 4294901760
    %976 = vmatpush1.msra.mxu0 %v975
    %977 = vmatprep.subr.mxu0 0.0
    %v978 = vand.u32 %v548, 4294901760
    %979 = vmatpush1.msra.mxu0 %v978
    %980 = vmatprep.subr.mxu0 0.0
    %v981 = vand.u32 %v549, 4294901760
    %982 = vmatpush1.msra.mxu0 %v981
    %983 = vmatprep.subr.mxu0 0.0
    %984 = vmatpush1.msra.mxu0 0.0
    %985 = vmatprep.subr.mxu0 0.0
    %986 = vmatpush1.msra.mxu0 0.0
    %987 = vmatprep.subr.mxu0 0.0
    %988 = vmatpush1.msra.mxu0 0.0
    %989 = vmatprep.subr.mxu0 0.0
    %990 = vmatpush1.msra.mxu0 0.0
    %991 = vmatprep.subr.mxu0 0.0
    %992 = vmatpush1.msra.mxu0 0.0
    %993 = vmatprep.subr.mxu0 0.0
    %994 = vmatpush1.msra.mxu0 0.0
    %995 = vmatprep.subr.mxu0 0.0
    %996 = vmatpush1.msra.mxu0 0.0
    %997 = vmatprep.subr.mxu0 0.0
    %998 = vmatpush1.msra.mxu0 0.0
    %999 = vmatprep.subr.mxu0 0.0
    %1000 = vmatpush1.msra.mxu0 0.0
    %1001 = vmatprep.subr.mxu0 0.0
    %1002 = vmatpush1.msra.mxu0 0.0
    %1003 = vmatprep.subr.mxu0 0.0
    %1004 = vmatpush1.msra.mxu0 0.0
    %1005 = vmatprep.subr.mxu0 0.0
    %1006 = vmatpush1.msra.mxu0 0.0
    %1007 = vmatprep.subr.mxu0 0.0
    %1008 = vmatpush1.msra.mxu0 0.0
    %1009 = vmatprep.subr.mxu0 0.0
    %1010 = vmatpush1.msra.mxu0 0.0
    %1011 = vmatprep.subr.mxu0 0.0
    %1012 = vmatpush1.msra.mxu0 0.0
    %1013 = vmatprep.subr.mxu0 0.0
    %1014 = vmatpush1.msra.mxu0 0.0
    %1015 = vmatprep.subr.mxu0 0.0
    %1016 = vmatpush1.msra.mxu0 0.0
    %1017 = vmatprep.subr.mxu0 0.0
    %1018 = vmatpush1.msra.mxu0 0.0
    %1019 = vmatprep.subr.mxu0 0.0
    %1020 = vmatpush1.msra.mxu0 0.0
    %1021 = vmatprep.subr.mxu0 0.0
    %1022 = vmatpush1.msra.mxu0 0.0
    %1023 = vmatprep.subr.mxu0 0.0
    %1024 = vmatpush1.msra.mxu0 0.0
    %1025 = vmatprep.subr.mxu0 0.0
    %1026 = vmatpush1.msra.mxu0 0.0
    %1027 = vmatprep.subr.mxu0 0.0
    %1028 = vmatpush1.msra.mxu0 0.0
    %1029 = vmatprep.subr.mxu0 0.0
    %1030 = vmatpush1.msra.mxu0 0.0
    %1031 = vmatprep.subr.mxu0 0.0
    %1032 = vmatpush1.msra.mxu0 0.0
    %1033 = vmatprep.subr.mxu0 0.0
    %1034 = vmatpush1.msra.mxu0 0.0
    %1035 = vmatprep.subr.mxu0 0.0
    %1036 = vmatpush1.msra.mxu0 0.0
    %1037 = vmatprep.subr.mxu0 0.0
    %1038 = vmatpush1.msra.mxu0 0.0
    %1039 = vmatprep.mubr.f32.mxu0 0.0
    %v1040 = vand.u32 %v559, 4294901760
    %1041 = vmatmul.mubr.f32.gmra.mrb[0].mxu0 %v1040
    %v1042 = vpop.f32.mrb[0].mxu0
    %v1043 = vadd.f32 %v968, %v1042
    %v1044 = vpop.f32.mrb[0].mxu0
    %1045 = vdwg.mxu0
    %v1046 = vmul.f32 %v1043, 0.51
    %v1047 = vmul.f32 %v1043, %v1043
    %v1048 = vadd.f32 %v1047, 1.4210855e-14
    %v1049 = vrsqrt.pop %v1048
    %v1050 = vmul.f32 %v1048, %v1049
    %vm1051 = vcmp.eq.f32.partialorder %v1048, inf
    %v1052 = vsel %vm1051, %v1048, %v1050
    %vm1053 = vcmp.eq.f32.partialorder %v1048, 0.0
    %v1054 = vand.u32 %v1048, 2147483648
    %v1055 = vsel %vm1053, %v1054, %v1052
    %v1056 = vmul.f32 %v1055, 0.49
    %v1057 = vadd.f32 %v1046, %v1056
    %v1058 = vsub.f32 %v1057, 5.8412553e-08
    %v1059 = vld [vmem:[#allocation4] sm:$0xff]
    %v1060 = vld [vmem:[#allocation4 + $0x8] sm:$0xff]
    %v1061 = vld [vmem:[#allocation4 + $0x10] sm:$0xff]
    %v1062 = vld [vmem:[#allocation4 + $0x18] sm:$0xff]
    %v1063 = vld [vmem:[%s6] sm:$0x1]
    %v1065 = vlaneseq
    %v1066 = vshrl.u32 %v1065, 7
    %v1067 = vsub.s32 0, %v1066
    %v1068 = vrot.slane %v1063, %v1067
    %v1071 = vsel %vm557, %v1058, 0
    %1073 = vmatprep.subr.mxu0 0.0
    %v1074 = vand.u32 %v1059, 4294901760
    %1075 = vmatpush1.msra.mxu0 %v1074
    %1076 = vmatprep.subr.mxu0 0.0
    %v1077 = vand.u32 %v1060, 4294901760
    %1078 = vmatpush1.msra.mxu0 %v1077
    %1079 = vmatprep.subr.mxu0 0.0
    %v1080 = vand.u32 %v1061, 4294901760
    %1081 = vmatpush1.msra.mxu0 %v1080
    %1082 = vmatprep.subr.mxu0 0.0
    %v1083 = vand.u32 %v1062, 4294901760
    %1084 = vmatpush1.msra.mxu0 %v1083
    %1085 = vmatprep.subr.mxu0 0.0
    %1086 = vmatpush1.msra.mxu0 0.0
    %1087 = vmatprep.subr.mxu0 0.0
    %1088 = vmatpush1.msra.mxu0 0.0
    %1089 = vmatprep.subr.mxu0 0.0
    %1090 = vmatpush1.msra.mxu0 0.0
    %1091 = vmatprep.subr.mxu0 0.0
    %1092 = vmatpush1.msra.mxu0 0.0
    %1093 = vmatprep.subr.mxu0 0.0
    %1094 = vmatpush1.msra.mxu0 0.0
    %1095 = vmatprep.subr.mxu0 0.0
    %1096 = vmatpush1.msra.mxu0 0.0
    %1097 = vmatprep.subr.mxu0 0.0
    %1098 = vmatpush1.msra.mxu0 0.0
    %1099 = vmatprep.subr.mxu0 0.0
    %1100 = vmatpush1.msra.mxu0 0.0
    %1101 = vmatprep.subr.mxu0 0.0
    %1102 = vmatpush1.msra.mxu0 0.0
    %1103 = vmatprep.subr.mxu0 0.0
    %1104 = vmatpush1.msra.mxu0 0.0
    %1105 = vmatprep.subr.mxu0 0.0
    %1106 = vmatpush1.msra.mxu0 0.0
    %1107 = vmatprep.subr.mxu0 0.0
    %1108 = vmatpush1.msra.mxu0 0.0
    %1109 = vmatprep.subr.mxu0 0.0
    %1110 = vmatpush1.msra.mxu0 0.0
    %1111 = vmatprep.subr.mxu0 0.0
    %1112 = vmatpush1.msra.mxu0 0.0
    %1113 = vmatprep.subr.mxu0 0.0
    %1114 = vmatpush1.msra.mxu0 0.0
    %1115 = vmatprep.subr.mxu0 0.0
    %1116 = vmatpush1.msra.mxu0 0.0
    %1117 = vmatprep.subr.mxu0 0.0
    %1118 = vmatpush1.msra.mxu0 0.0
    %1119 = vmatprep.subr.mxu0 0.0
    %1120 = vmatpush1.msra.mxu0 0.0
    %1121 = vmatprep.subr.mxu0 0.0
    %1122 = vmatpush1.msra.mxu0 0.0
    %1123 = vmatprep.subr.mxu0 0.0
    %1124 = vmatpush1.msra.mxu0 0.0
    %1125 = vmatprep.subr.mxu0 0.0
    %1126 = vmatpush1.msra.mxu0 0.0
    %1127 = vmatprep.subr.mxu0 0.0
    %1128 = vmatpush1.msra.mxu0 0.0
    %1129 = vmatprep.subr.mxu0 0.0
    %1130 = vmatpush1.msra.mxu0 0.0
    %1131 = vmatprep.subr.mxu0 0.0
    %1132 = vmatpush1.msra.mxu0 0.0
    %1133 = vmatprep.subr.mxu0 0.0
    %1134 = vmatpush1.msra.mxu0 0.0
    %1135 = vmatprep.subr.mxu0 0.0
    %1136 = vmatpush1.msra.mxu0 0.0
    %1137 = vmatprep.subr.mxu0 0.0
    %1138 = vmatpush1.msra.mxu0 0.0
    %1139 = vmatprep.subr.mxu0 0.0
    %1140 = vmatpush1.msra.mxu0 0.0
    %1141 = vmatprep.mubr.f32.mxu0 0.0
    %v1142 = vand.u32 %v1071, 4294901760
    %v1143 = vsub.f32 %v1071, %v1142
    %v1144 = vand.u32 %v1143, 4294901760
    %v1145 = vsub.f32 %v1143, %v1144
    %v1146 = vand.u32 %v1145, 4294901760
    %1147 = vmatmul.mubr.f32.gmra.mrb[0].mxu0 %v1146
    %v1148 = vpop.f32.mrb[0].mxu0
    %v1149 = vadd.f32 %v1068, %v1148
    %v1150 = vpop.f32.mrb[0].mxu0
    %1151 = vdwg.mxu0
    %1152 = vmatprep.subr.mxu0 0.0
    %v1153 = vand.u32 %v1059, 4294901760
    %v1154 = vsub.f32 %v1059, %v1153
    %v1155 = vand.u32 %v1154, 4294901760
    %v1156 = vsub.f32 %v1154, %v1155
    %v1157 = vand.u32 %v1156, 4294901760
    %1158 = vmatpush1.msra.mxu0 %v1157
    %1159 = vmatprep.subr.mxu0 0.0
    %v1160 = vand.u32 %v1060, 4294901760
    %v1161 = vsub.f32 %v1060, %v1160
    %v1162 = vand.u32 %v1161, 4294901760
    %v1163 = vsub.f32 %v1161, %v1162
    %v1164 = vand.u32 %v1163, 4294901760
    %1165 = vmatpush1.msra.mxu0 %v1164
    %1166 = vmatprep.subr.mxu0 0.0
    %v1167 = vand.u32 %v1061, 4294901760
    %v1168 = vsub.f32 %v1061, %v1167
    %v1169 = vand.u32 %v1168, 4294901760
    %v1170 = vsub.f32 %v1168, %v1169
    %v1171 = vand.u32 %v1170, 4294901760
    %1172 = vmatpush1.msra.mxu0 %v1171
    %1173 = vmatprep.subr.mxu0 0.0
    %v1174 = vand.u32 %v1062, 4294901760
    %v1175 = vsub.f32 %v1062, %v1174
    %v1176 = vand.u32 %v1175, 4294901760
    %v1177 = vsub.f32 %v1175, %v1176
    %v1178 = vand.u32 %v1177, 4294901760
    %1179 = vmatpush1.msra.mxu0 %v1178
    %1180 = vmatprep.subr.mxu0 0.0
    %1181 = vmatpush1.msra.mxu0 0.0
    %1182 = vmatprep.subr.mxu0 0.0
    %1183 = vmatpush1.msra.mxu0 0.0
    %1184 = vmatprep.subr.mxu0 0.0
    %1185 = vmatpush1.msra.mxu0 0.0
    %1186 = vmatprep.subr.mxu0 0.0
    %1187 = vmatpush1.msra.mxu0 0.0
    %1188 = vmatprep.subr.mxu0 0.0
    %1189 = vmatpush1.msra.mxu0 0.0
    %1190 = vmatprep.subr.mxu0 0.0
    %1191 = vmatpush1.msra.mxu0 0.0
    %1192 = vmatprep.subr.mxu0 0.0
    %1193 = vmatpush1.msra.mxu0 0.0
    %1194 = vmatprep.subr.mxu0 0.0
    %1195 = vmatpush1.msra.mxu0 0.0
    %1196 = vmatprep.subr.mxu0 0.0
    %1197 = vmatpush1.msra.mxu0 0.0
    %1198 = vmatprep.subr.mxu0 0.0
    %1199 = vmatpush1.msra.mxu0 0.0
    %1200 = vmatprep.subr.mxu0 0.0
    %1201 = vmatpush1.msra.mxu0 0.0
    %1202 = vmatprep.subr.mxu0 0.0
    %1203 = vmatpush1.msra.mxu0 0.0
    %1204 = vmatprep.subr.mxu0 0.0
    %1205 = vmatpush1.msra.mxu0 0.0
    %1206 = vmatprep.subr.mxu0 0.0
    %1207 = vmatpush1.msra.mxu0 0.0
    %1208 = vmatprep.subr.mxu0 0.0
    %1209 = vmatpush1.msra.mxu0 0.0
    %1210 = vmatprep.subr.mxu0 0.0
    %1211 = vmatpush1.msra.mxu0 0.0
    %1212 = vmatprep.subr.mxu0 0.0
    %1213 = vmatpush1.msra.mxu0 0.0
    %1214 = vmatprep.subr.mxu0 0.0
    %1215 = vmatpush1.msra.mxu0 0.0
    %1216 = vmatprep.subr.mxu0 0.0
    %1217 = vmatpush1.msra.mxu0 0.0
    %1218 = vmatprep.subr.mxu0 0.0
    %1219 = vmatpush1.msra.mxu0 0.0
    %1220 = vmatprep.subr.mxu0 0.0
    %1221 = vmatpush1.msra.mxu0 0.0
    %1222 = vmatprep.subr.mxu0 0.0
    %1223 = vmatpush1.msra.mxu0 0.0
    %1224 = vmatprep.subr.mxu0 0.0
    %1225 = vmatpush1.msra.mxu0 0.0
    %1226 = vmatprep.subr.mxu0 0.0
    %1227 = vmatpush1.msra.mxu0 0.0
    %1228 = vmatprep.subr.mxu0 0.0
    %1229 = vmatpush1.msra.mxu0 0.0
    %1230 = vmatprep.subr.mxu0 0.0
    %1231 = vmatpush1.msra.mxu0 0.0
    %1232 = vmatprep.subr.mxu0 0.0
    %1233 = vmatpush1.msra.mxu0 0.0
    %1234 = vmatprep.subr.mxu0 0.0
    %1235 = vmatpush1.msra.mxu0 0.0
    %1236 = vmatprep.mubr.f32.mxu0 0.0
    %v1237 = vand.u32 %v1071, 4294901760
    %1238 = vmatmul.mubr.f32.gmra.mrb[0].mxu0 %v1237
    %v1239 = vpop.f32.mrb[0].mxu0
    %v1240 = vadd.f32 %v1149, %v1239
    %v1241 = vpop.f32.mrb[0].mxu0
    %1242 = vdwg.mxu0
    %1243 = vmatprep.subr.mxu0 0.0
    %v1244 = vand.u32 %v1059, 4294901760
    %v1245 = vsub.f32 %v1059, %v1244
    %1246 = vmatpush1.msra.mxu0 %v1245
    %1247 = vmatprep.subr.mxu0 0.0
    %v1248 = vand.u32 %v1060, 4294901760
    %v1249 = vsub.f32 %v1060, %v1248
    %1250 = vmatpush1.msra.mxu0 %v1249
    %1251 = vmatprep.subr.mxu0 0.0
    %v1252 = vand.u32 %v1061, 4294901760
    %v1253 = vsub.f32 %v1061, %v1252
    %1254 = vmatpush1.msra.mxu0 %v1253
    %1255 = vmatprep.subr.mxu0 0.0
    %v1256 = vand.u32 %v1062, 4294901760
    %v1257 = vsub.f32 %v1062, %v1256
    %1258 = vmatpush1.msra.mxu0 %v1257
    %1259 = vmatprep.subr.mxu0 0.0
    %1260 = vmatpush1.msra.mxu0 0.0
    %1261 = vmatprep.subr.mxu0 0.0
    %1262 = vmatpush1.msra.mxu0 0.0
    %1263 = vmatprep.subr.mxu0 0.0
    %1264 = vmatpush1.msra.mxu0 0.0
    %1265 = vmatprep.subr.mxu0 0.0
    %1266 = vmatpush1.msra.mxu0 0.0
    %1267 = vmatprep.subr.mxu0 0.0
    %1268 = vmatpush1.msra.mxu0 0.0
    %1269 = vmatprep.subr.mxu0 0.0
    %1270 = vmatpush1.msra.mxu0 0.0
    %1271 = vmatprep.subr.mxu0 0.0
    %1272 = vmatpush1.msra.mxu0 0.0
    %1273 = vmatprep.subr.mxu0 0.0
    %1274 = vmatpush1.msra.mxu0 0.0
    %1275 = vmatprep.subr.mxu0 0.0
    %1276 = vmatpush1.msra.mxu0 0.0
    %1277 = vmatprep.subr.mxu0 0.0
    %1278 = vmatpush1.msra.mxu0 0.0
    %1279 = vmatprep.subr.mxu0 0.0
    %1280 = vmatpush1.msra.mxu0 0.0
    %1281 = vmatprep.subr.mxu0 0.0
    %1282 = vmatpush1.msra.mxu0 0.0
    %1283 = vmatprep.subr.mxu0 0.0
    %1284 = vmatpush1.msra.mxu0 0.0
    %1285 = vmatprep.subr.mxu0 0.0
    %1286 = vmatpush1.msra.mxu0 0.0
    %1287 = vmatprep.subr.mxu0 0.0
    %1288 = vmatpush1.msra.mxu0 0.0
    %1289 = vmatprep.subr.mxu0 0.0
    %1290 = vmatpush1.msra.mxu0 0.0
    %1291 = vmatprep.subr.mxu0 0.0
    %1292 = vmatpush1.msra.mxu0 0.0
    %1293 = vmatprep.subr.mxu0 0.0
    %1294 = vmatpush1.msra.mxu0 0.0
    %1295 = vmatprep.subr.mxu0 0.0
    %1296 = vmatpush1.msra.mxu0 0.0
    %1297 = vmatprep.subr.mxu0 0.0
    %1298 = vmatpush1.msra.mxu0 0.0
    %1299 = vmatprep.subr.mxu0 0.0
    %1300 = vmatpush1.msra.mxu0 0.0
    %1301 = vmatprep.subr.mxu0 0.0
    %1302 = vmatpush1.msra.mxu0 0.0
    %1303 = vmatprep.subr.mxu0 0.0
    %1304 = vmatpush1.msra.mxu0 0.0
    %1305 = vmatprep.subr.mxu0 0.0
    %1306 = vmatpush1.msra.mxu0 0.0
    %1307 = vmatprep.subr.mxu0 0.0
    %1308 = vmatpush1.msra.mxu0 0.0
    %1309 = vmatprep.subr.mxu0 0.0
    %1310 = vmatpush1.msra.mxu0 0.0
    %1311 = vmatprep.subr.mxu0 0.0
    %1312 = vmatpush1.msra.mxu0 0.0
    %1313 = vmatprep.subr.mxu0 0.0
    %1314 = vmatpush1.msra.mxu0 0.0
    %1315 = vmatprep.mubr.f32.mxu0 0.0
    %v1316 = vand.u32 %v1071, 4294901760
    %v1317 = vsub.f32 %v1071, %v1316
    %1318 = vmatmul.mubr.f32.gmra.mrb[0].mxu0 %v1317
    %v1319 = vpop.f32.mrb[0].mxu0
    %v1320 = vadd.f32 %v1240, %v1319
    %v1321 = vpop.f32.mrb[0].mxu0
    %1322 = vdwg.mxu0
    %1323 = vmatprep.subr.mxu0 0.0
    %v1324 = vand.u32 %v1059, 4294901760
    %1325 = vmatpush1.msra.mxu0 %v1324
    %1326 = vmatprep.subr.mxu0 0.0
    %v1327 = vand.u32 %v1060, 4294901760
    %1328 = vmatpush1.msra.mxu0 %v1327
    %1329 = vmatprep.subr.mxu0 0.0
    %v1330 = vand.u32 %v1061, 4294901760
    %1331 = vmatpush1.msra.mxu0 %v1330
    %1332 = vmatprep.subr.mxu0 0.0
    %v1333 = vand.u32 %v1062, 4294901760
    %1334 = vmatpush1.msra.mxu0 %v1333
    %1335 = vmatprep.subr.mxu0 0.0
    %1336 = vmatpush1.msra.mxu0 0.0
    %1337 = vmatprep.subr.mxu0 0.0
    %1338 = vmatpush1.msra.mxu0 0.0
    %1339 = vmatprep.subr.mxu0 0.0
    %1340 = vmatpush1.msra.mxu0 0.0
    %1341 = vmatprep.subr.mxu0 0.0
    %1342 = vmatpush1.msra.mxu0 0.0
    %1343 = vmatprep.subr.mxu0 0.0
    %1344 = vmatpush1.msra.mxu0 0.0
    %1345 = vmatprep.subr.mxu0 0.0
    %1346 = vmatpush1.msra.mxu0 0.0
    %1347 = vmatprep.subr.mxu0 0.0
    %1348 = vmatpush1.msra.mxu0 0.0
    %1349 = vmatprep.subr.mxu0 0.0
    %1350 = vmatpush1.msra.mxu0 0.0
    %1351 = vmatprep.subr.mxu0 0.0
    %1352 = vmatpush1.msra.mxu0 0.0
    %1353 = vmatprep.subr.mxu0 0.0
    %1354 = vmatpush1.msra.mxu0 0.0
    %1355 = vmatprep.subr.mxu0 0.0
    %1356 = vmatpush1.msra.mxu0 0.0
    %1357 = vmatprep.subr.mxu0 0.0
    %1358 = vmatpush1.msra.mxu0 0.0
    %1359 = vmatprep.subr.mxu0 0.0
    %1360 = vmatpush1.msra.mxu0 0.0
    %1361 = vmatprep.subr.mxu0 0.0
    %1362 = vmatpush1.msra.mxu0 0.0
    %1363 = vmatprep.subr.mxu0 0.0
    %1364 = vmatpush1.msra.mxu0 0.0
    %1365 = vmatprep.subr.mxu0 0.0
    %1366 = vmatpush1.msra.mxu0 0.0
    %1367 = vmatprep.subr.mxu0 0.0
    %1368 = vmatpush1.msra.mxu0 0.0
    %1369 = vmatprep.subr.mxu0 0.0
    %1370 = vmatpush1.msra.mxu0 0.0
    %1371 = vmatprep.subr.mxu0 0.0
    %1372 = vmatpush1.msra.mxu0 0.0
    %1373 = vmatprep.subr.mxu0 0.0
    %1374 = vmatpush1.msra.mxu0 0.0
    %1375 = vmatprep.subr.mxu0 0.0
    %1376 = vmatpush1.msra.mxu0 0.0
    %1377 = vmatprep.subr.mxu0 0.0
    %1378 = vmatpush1.msra.mxu0 0.0
    %1379 = vmatprep.subr.mxu0 0.0
    %1380 = vmatpush1.msra.mxu0 0.0
    %1381 = vmatprep.subr.mxu0 0.0
    %1382 = vmatpush1.msra.mxu0 0.0
    %1383 = vmatprep.subr.mxu0 0.0
    %1384 = vmatpush1.msra.mxu0 0.0
    %1385 = vmatprep.subr.mxu0 0.0
    %1386 = vmatpush1.msra.mxu0 0.0
    %1387 = vmatprep.subr.mxu0 0.0
    %1388 = vmatpush1.msra.mxu0 0.0
    %1389 = vmatprep.subr.mxu0 0.0
    %1390 = vmatpush1.msra.mxu0 0.0
    %1391 = vmatprep.mubr.f32.mxu0 0.0
    %v1392 = vand.u32 %v1071, 4294901760
    %v1393 = vsub.f32 %v1071, %v1392
    %v1394 = vand.u32 %v1393, 4294901760
    %1395 = vmatmul.mubr.f32.gmra.mrb[0].mxu0 %v1394
    %v1396 = vpop.f32.mrb[0].mxu0
    %v1397 = vadd.f32 %v1320, %v1396
    %v1398 = vpop.f32.mrb[0].mxu0
    %1399 = vdwg.mxu0
    %1400 = vmatprep.subr.mxu0 0.0
    %v1401 = vand.u32 %v1059, 4294901760
    %v1402 = vsub.f32 %v1059, %v1401
    %v1403 = vand.u32 %v1402, 4294901760
    %1404 = vmatpush1.msra.mxu0 %v1403
    %1405 = vmatprep.subr.mxu0 0.0
    %v1406 = vand.u32 %v1060, 4294901760
    %v1407 = vsub.f32 %v1060, %v1406
    %v1408 = vand.u32 %v1407, 4294901760
    %1409 = vmatpush1.msra.mxu0 %v1408
    %1410 = vmatprep.subr.mxu0 0.0
    %v1411 = vand.u32 %v1061, 4294901760
    %v1412 = vsub.f32 %v1061, %v1411
    %v1413 = vand.u32 %v1412, 4294901760
    %1414 = vmatpush1.msra.mxu0 %v1413
    %1415 = vmatprep.subr.mxu0 0.0
    %v1416 = vand.u32 %v1062, 4294901760
    %v1417 = vsub.f32 %v1062, %v1416
    %v1418 = vand.u32 %v1417, 4294901760
    %1419 = vmatpush1.msra.mxu0 %v1418
    %1420 = vmatprep.subr.mxu0 0.0
    %1421 = vmatpush1.msra.mxu0 0.0
    %1422 = vmatprep.subr.mxu0 0.0
    %1423 = vmatpush1.msra.mxu0 0.0
    %1424 = vmatprep.subr.mxu0 0.0
    %1425 = vmatpush1.msra.mxu0 0.0
    %1426 = vmatprep.subr.mxu0 0.0
    %1427 = vmatpush1.msra.mxu0 0.0
    %1428 = vmatprep.subr.mxu0 0.0
    %1429 = vmatpush1.msra.mxu0 0.0
    %1430 = vmatprep.subr.mxu0 0.0
    %1431 = vmatpush1.msra.mxu0 0.0
    %1432 = vmatprep.subr.mxu0 0.0
    %1433 = vmatpush1.msra.mxu0 0.0
    %1434 = vmatprep.subr.mxu0 0.0
    %1435 = vmatpush1.msra.mxu0 0.0
    %1436 = vmatprep.subr.mxu0 0.0
    %1437 = vmatpush1.msra.mxu0 0.0
    %1438 = vmatprep.subr.mxu0 0.0
    %1439 = vmatpush1.msra.mxu0 0.0
    %1440 = vmatprep.subr.mxu0 0.0
    %1441 = vmatpush1.msra.mxu0 0.0
    %1442 = vmatprep.subr.mxu0 0.0
    %1443 = vmatpush1.msra.mxu0 0.0
    %1444 = vmatprep.subr.mxu0 0.0
    %1445 = vmatpush1.msra.mxu0 0.0
    %1446 = vmatprep.subr.mxu0 0.0
    %1447 = vmatpush1.msra.mxu0 0.0
    %1448 = vmatprep.subr.mxu0 0.0
    %1449 = vmatpush1.msra.mxu0 0.0
    %1450 = vmatprep.subr.mxu0 0.0
    %1451 = vmatpush1.msra.mxu0 0.0
    %1452 = vmatprep.subr.mxu0 0.0
    %1453 = vmatpush1.msra.mxu0 0.0
    %1454 = vmatprep.subr.mxu0 0.0
    %1455 = vmatpush1.msra.mxu0 0.0
    %1456 = vmatprep.subr.mxu0 0.0
    %1457 = vmatpush1.msra.mxu0 0.0
    %1458 = vmatprep.subr.mxu0 0.0
    %1459 = vmatpush1.msra.mxu0 0.0
    %1460 = vmatprep.subr.mxu0 0.0
    %1461 = vmatpush1.msra.mxu0 0.0
    %1462 = vmatprep.subr.mxu0 0.0
    %1463 = vmatpush1.msra.mxu0 0.0
    %1464 = vmatprep.subr.mxu0 0.0
    %1465 = vmatpush1.msra.mxu0 0.0
    %1466 = vmatprep.subr.mxu0 0.0
    %1467 = vmatpush1.msra.mxu0 0.0
    %1468 = vmatprep.subr.mxu0 0.0
    %1469 = vmatpush1.msra.mxu0 0.0
    %1470 = vmatprep.subr.mxu0 0.0
    %1471 = vmatpush1.msra.mxu0 0.0
    %1472 = vmatprep.subr.mxu0 0.0
    %1473 = vmatpush1.msra.mxu0 0.0
    %1474 = vmatprep.subr.mxu0 0.0
    %1475 = vmatpush1.msra.mxu0 0.0
    %1476 = vmatprep.mubr.f32.mxu0 0.0
    %v1477 = vand.u32 %v1071, 4294901760
    %1478 = vmatmul.mubr.f32.gmra.mrb[0].mxu0 %v1477
    %v1479 = vpop.f32.mrb[0].mxu0
    %v1480 = vadd.f32 %v1397, %v1479
    %v1481 = vpop.f32.mrb[0].mxu0
    %1482 = vdwg.mxu0
    %1483 = vmatprep.subr.mxu0 0.0
    %v1484 = vand.u32 %v1059, 4294901760
    %1485 = vmatpush1.msra.mxu0 %v1484
    %1486 = vmatprep.subr.mxu0 0.0
    %v1487 = vand.u32 %v1060, 4294901760
    %1488 = vmatpush1.msra.mxu0 %v1487
    %1489 = vmatprep.subr.mxu0 0.0
    %v1490 = vand.u32 %v1061, 4294901760
    %1491 = vmatpush1.msra.mxu0 %v1490
    %1492 = vmatprep.subr.mxu0 0.0
    %v1493 = vand.u32 %v1062, 4294901760
    %1494 = vmatpush1.msra.mxu0 %v1493
    %1495 = vmatprep.subr.mxu0 0.0
    %1496 = vmatpush1.msra.mxu0 0.0
    %1497 = vmatprep.subr.mxu0 0.0
    %1498 = vmatpush1.msra.mxu0 0.0
    %1499 = vmatprep.subr.mxu0 0.0
    %1500 = vmatpush1.msra.mxu0 0.0
    %1501 = vmatprep.subr.mxu0 0.0
    %1502 = vmatpush1.msra.mxu0 0.0
    %1503 = vmatprep.subr.mxu0 0.0
    %1504 = vmatpush1.msra.mxu0 0.0
    %1505 = vmatprep.subr.mxu0 0.0
    %1506 = vmatpush1.msra.mxu0 0.0
    %1507 = vmatprep.subr.mxu0 0.0
    %1508 = vmatpush1.msra.mxu0 0.0
    %1509 = vmatprep.subr.mxu0 0.0
    %1510 = vmatpush1.msra.mxu0 0.0
    %1511 = vmatprep.subr.mxu0 0.0
    %1512 = vmatpush1.msra.mxu0 0.0
    %1513 = vmatprep.subr.mxu0 0.0
    %1514 = vmatpush1.msra.mxu0 0.0
    %1515 = vmatprep.subr.mxu0 0.0
    %1516 = vmatpush1.msra.mxu0 0.0
    %1517 = vmatprep.subr.mxu0 0.0
    %1518 = vmatpush1.msra.mxu0 0.0
    %1519 = vmatprep.subr.mxu0 0.0
    %1520 = vmatpush1.msra.mxu0 0.0
    %1521 = vmatprep.subr.mxu0 0.0
    %1522 = vmatpush1.msra.mxu0 0.0
    %1523 = vmatprep.subr.mxu0 0.0
    %1524 = vmatpush1.msra.mxu0 0.0
    %1525 = vmatprep.subr.mxu0 0.0
    %1526 = vmatpush1.msra.mxu0 0.0
    %1527 = vmatprep.subr.mxu0 0.0
    %1528 = vmatpush1.msra.mxu0 0.0
    %1529 = vmatprep.subr.mxu0 0.0
    %1530 = vmatpush1.msra.mxu0 0.0
    %1531 = vmatprep.subr.mxu0 0.0
    %1532 = vmatpush1.msra.mxu0 0.0
    %1533 = vmatprep.subr.mxu0 0.0
    %1534 = vmatpush1.msra.mxu0 0.0
    %1535 = vmatprep.subr.mxu0 0.0
    %1536 = vmatpush1.msra.mxu0 0.0
    %1537 = vmatprep.subr.mxu0 0.0
    %1538 = vmatpush1.msra.mxu0 0.0
    %1539 = vmatprep.subr.mxu0 0.0
    %1540 = vmatpush1.msra.mxu0 0.0
    %1541 = vmatprep.subr.mxu0 0.0
    %1542 = vmatpush1.msra.mxu0 0.0
    %1543 = vmatprep.subr.mxu0 0.0
    %1544 = vmatpush1.msra.mxu0 0.0
    %1545 = vmatprep.subr.mxu0 0.0
    %1546 = vmatpush1.msra.mxu0 0.0
    %1547 = vmatprep.subr.mxu0 0.0
    %1548 = vmatpush1.msra.mxu0 0.0
    %1549 = vmatprep.subr.mxu0 0.0
    %1550 = vmatpush1.msra.mxu0 0.0
    %1551 = vmatprep.mubr.f32.mxu0 0.0
    %v1552 = vand.u32 %v1071, 4294901760
    %1553 = vmatmul.mubr.f32.gmra.mrb[0].mxu0 %v1552
    %v1554 = vpop.f32.mrb[0].mxu0
    %v1555 = vadd.f32 %v1480, %v1554
    %v1556 = vpop.f32.mrb[0].mxu0
    %1557 = vdwg.mxu0
    %v1558 = vmul.f32 %v1555, 0.51
    %v1559 = vmul.f32 %v1555, %v1555
    %v1560 = vadd.f32 %v1559, 1.4210855e-14
    %v1561 = vrsqrt.pop %v1560
    %v1562 = vmul.f32 %v1560, %v1561
    %vm1563 = vcmp.eq.f32.partialorder %v1560, inf
    %v1564 = vsel %vm1563, %v1560, %v1562
    %vm1565 = vcmp.eq.f32.partialorder %v1560, 0.0
    %v1566 = vand.u32 %v1560, 2147483648
    %v1567 = vsel %vm1565, %v1566, %v1564
    %v1568 = vmul.f32 %v1567, 0.49
    %v1569 = vadd.f32 %v1558, %v1568
    %v1570 = vsub.f32 %v1569, 5.8412553e-08
    %v1571 = vld [vmem:[%s7] sm:$0xff]
    %v1572 = vld [vmem:[%s7 + $0x8] sm:$0xff]
    %v1573 = vld [vmem:[%s7 + $0x10] sm:$0xff]
    %v1574 = vld [vmem:[%s7 + $0x18] sm:$0xff]
    %v1575 = vld [vmem:[%s8] sm:$0x1]
    %v1577 = vlaneseq
    %v1578 = vshrl.u32 %v1577, 7
    %v1579 = vsub.s32 0, %v1578
    %v1580 = vrot.slane %v1575, %v1579
    %v1583 = vsel %vm557, %v1570, 0
    %1585 = vmatprep.subr.mxu0 0.0
    %v1586 = vand.u32 %v1571, 4294901760
    %1587 = vmatpush1.msra.mxu0 %v1586
    %1588 = vmatprep.subr.mxu0 0.0
    %v1589 = vand.u32 %v1572, 4294901760
    %1590 = vmatpush1.msra.mxu0 %v1589
    %1591 = vmatprep.subr.mxu0 0.0
    %v1592 = vand.u32 %v1573, 4294901760
    %1593 = vmatpush1.msra.mxu0 %v1592
    %1594 = vmatprep.subr.mxu0 0.0
    %v1595 = vand.u32 %v1574, 4294901760
    %1596 = vmatpush1.msra.mxu0 %v1595
    %1597 = vmatprep.subr.mxu0 0.0
    %1598 = vmatpush1.msra.mxu0 0.0
    %1599 = vmatprep.subr.mxu0 0.0
    %1600 = vmatpush1.msra.mxu0 0.0
    %1601 = vmatprep.subr.mxu0 0.0
    %1602 = vmatpush1.msra.mxu0 0.0
    %1603 = vmatprep.subr.mxu0 0.0
    %1604 = vmatpush1.msra.mxu0 0.0
    %1605 = vmatprep.subr.mxu0 0.0
    %1606 = vmatpush1.msra.mxu0 0.0
    %1607 = vmatprep.subr.mxu0 0.0
    %1608 = vmatpush1.msra.mxu0 0.0
    %1609 = vmatprep.subr.mxu0 0.0
    %1610 = vmatpush1.msra.mxu0 0.0
    %1611 = vmatprep.subr.mxu0 0.0
    %1612 = vmatpush1.msra.mxu0 0.0
    %1613 = vmatprep.subr.mxu0 0.0
    %1614 = vmatpush1.msra.mxu0 0.0
    %1615 = vmatprep.subr.mxu0 0.0
    %1616 = vmatpush1.msra.mxu0 0.0
    %1617 = vmatprep.subr.mxu0 0.0
    %1618 = vmatpush1.msra.mxu0 0.0
    %1619 = vmatprep.subr.mxu0 0.0
    %1620 = vmatpush1.msra.mxu0 0.0
    %1621 = vmatprep.subr.mxu0 0.0
    %1622 = vmatpush1.msra.mxu0 0.0
    %1623 = vmatprep.subr.mxu0 0.0
    %1624 = vmatpush1.msra.mxu0 0.0
    %1625 = vmatprep.subr.mxu0 0.0
    %1626 = vmatpush1.msra.mxu0 0.0
    %1627 = vmatprep.subr.mxu0 0.0
    %1628 = vmatpush1.msra.mxu0 0.0
    %1629 = vmatprep.subr.mxu0 0.0
    %1630 = vmatpush1.msra.mxu0 0.0
    %1631 = vmatprep.subr.mxu0 0.0
    %1632 = vmatpush1.msra.mxu0 0.0
    %1633 = vmatprep.subr.mxu0 0.0
    %1634 = vmatpush1.msra.mxu0 0.0
    %1635 = vmatprep.subr.mxu0 0.0
    %1636 = vmatpush1.msra.mxu0 0.0
    %1637 = vmatprep.subr.mxu0 0.0
    %1638 = vmatpush1.msra.mxu0 0.0
    %1639 = vmatprep.subr.mxu0 0.0
    %1640 = vmatpush1.msra.mxu0 0.0
    %1641 = vmatprep.subr.mxu0 0.0
    %1642 = vmatpush1.msra.mxu0 0.0
    %1643 = vmatprep.subr.mxu0 0.0
    %1644 = vmatpush1.msra.mxu0 0.0
    %1645 = vmatprep.subr.mxu0 0.0
    %1646 = vmatpush1.msra.mxu0 0.0
    %1647 = vmatprep.subr.mxu0 0.0
    %1648 = vmatpush1.msra.mxu0 0.0
    %1649 = vmatprep.subr.mxu0 0.0
    %1650 = vmatpush1.msra.mxu0 0.0
    %1651 = vmatprep.subr.mxu0 0.0
    %1652 = vmatpush1.msra.mxu0 0.0
    %1653 = vmatprep.mubr.f32.mxu0 0.0
    %v1654 = vand.u32 %v1583, 4294901760
    %v1655 = vsub.f32 %v1583, %v1654
    %v1656 = vand.u32 %v1655, 4294901760
    %v1657 = vsub.f32 %v1655, %v1656
    %v1658 = vand.u32 %v1657, 4294901760
    %1659 = vmatmul.mubr.f32.gmra.mrb[0].mxu0 %v1658
    %v1660 = vpop.f32.mrb[0].mxu0
    %v1661 = vadd.f32 %v1580, %v1660
    %v1662 = vpop.f32.mrb[0].mxu0
    %1663 = vdwg.mxu0
    %1664 = vmatprep.subr.mxu0 0.0
    %v1665 = vand.u32 %v1571, 4294901760
    %v1666 = vsub.f32 %v1571, %v1665
    %v1667 = vand.u32 %v1666, 4294901760
    %v1668 = vsub.f32 %v1666, %v1667
    %v1669 = vand.u32 %v1668, 4294901760
    %1670 = vmatpush1.msra.mxu0 %v1669
    %1671 = vmatprep.subr.mxu0 0.0
    %v1672 = vand.u32 %v1572, 4294901760
    %v1673 = vsub.f32 %v1572, %v1672
    %v1674 = vand.u32 %v1673, 4294901760
    %v1675 = vsub.f32 %v1673, %v1674
    %v1676 = vand.u32 %v1675, 4294901760
    %1677 = vmatpush1.msra.mxu0 %v1676
    %1678 = vmatprep.subr.mxu0 0.0
    %v1679 = vand.u32 %v1573, 4294901760
    %v1680 = vsub.f32 %v1573, %v1679
    %v1681 = vand.u32 %v1680, 4294901760
    %v1682 = vsub.f32 %v1680, %v1681
    %v1683 = vand.u32 %v1682, 4294901760
    %1684 = vmatpush1.msra.mxu0 %v1683
    %1685 = vmatprep.subr.mxu0 0.0
    %v1686 = vand.u32 %v1574, 4294901760
    %v1687 = vsub.f32 %v1574, %v1686
    %v1688 = vand.u32 %v1687, 4294901760
    %v1689 = vsub.f32 %v1687, %v1688
    %v1690 = vand.u32 %v1689, 4294901760
    %1691 = vmatpush1.msra.mxu0 %v1690
    %1692 = vmatprep.subr.mxu0 0.0
    %1693 = vmatpush1.msra.mxu0 0.0
    %1694 = vmatprep.subr.mxu0 0.0
    %1695 = vmatpush1.msra.mxu0 0.0
    %1696 = vmatprep.subr.mxu0 0.0
    %1697 = vmatpush1.msra.mxu0 0.0
    %1698 = vmatprep.subr.mxu0 0.0
    %1699 = vmatpush1.msra.mxu0 0.0
    %1700 = vmatprep.subr.mxu0 0.0
    %1701 = vmatpush1.msra.mxu0 0.0
    %1702 = vmatprep.subr.mxu0 0.0
    %1703 = vmatpush1.msra.mxu0 0.0
    %1704 = vmatprep.subr.mxu0 0.0
    %1705 = vmatpush1.msra.mxu0 0.0
    %1706 = vmatprep.subr.mxu0 0.0
    %1707 = vmatpush1.msra.mxu0 0.0
    %1708 = vmatprep.subr.mxu0 0.0
    %1709 = vmatpush1.msra.mxu0 0.0
    %1710 = vmatprep.subr.mxu0 0.0
    %1711 = vmatpush1.msra.mxu0 0.0
    %1712 = vmatprep.subr.mxu0 0.0
    %1713 = vmatpush1.msra.mxu0 0.0
    %1714 = vmatprep.subr.mxu0 0.0
    %1715 = vmatpush1.msra.mxu0 0.0
    %1716 = vmatprep.subr.mxu0 0.0
    %1717 = vmatpush1.msra.mxu0 0.0
    %1718 = vmatprep.subr.mxu0 0.0
    %1719 = vmatpush1.msra.mxu0 0.0
    %1720 = vmatprep.subr.mxu0 0.0
    %1721 = vmatpush1.msra.mxu0 0.0
    %1722 = vmatprep.subr.mxu0 0.0
    %1723 = vmatpush1.msra.mxu0 0.0
    %1724 = vmatprep.subr.mxu0 0.0
    %1725 = vmatpush1.msra.mxu0 0.0
    %1726 = vmatprep.subr.mxu0 0.0
    %1727 = vmatpush1.msra.mxu0 0.0
    %1728 = vmatprep.subr.mxu0 0.0
    %1729 = vmatpush1.msra.mxu0 0.0
    %1730 = vmatprep.subr.mxu0 0.0
    %1731 = vmatpush1.msra.mxu0 0.0
    %1732 = vmatprep.subr.mxu0 0.0
    %1733 = vmatpush1.msra.mxu0 0.0
    %1734 = vmatprep.subr.mxu0 0.0
    %1735 = vmatpush1.msra.mxu0 0.0
    %1736 = vmatprep.subr.mxu0 0.0
    %1737 = vmatpush1.msra.mxu0 0.0
    %1738 = vmatprep.subr.mxu0 0.0
    %1739 = vmatpush1.msra.mxu0 0.0
    %1740 = vmatprep.subr.mxu0 0.0
    %1741 = vmatpush1.msra.mxu0 0.0
    %1742 = vmatprep.subr.mxu0 0.0
    %1743 = vmatpush1.msra.mxu0 0.0
    %1744 = vmatprep.subr.mxu0 0.0
    %1745 = vmatpush1.msra.mxu0 0.0
    %1746 = vmatprep.subr.mxu0 0.0
    %1747 = vmatpush1.msra.mxu0 0.0
    %1748 = vmatprep.mubr.f32.mxu0 0.0
    %v1749 = vand.u32 %v1583, 4294901760
    %1750 = vmatmul.mubr.f32.gmra.mrb[0].mxu0 %v1749
    %v1751 = vpop.f32.mrb[0].mxu0
    %v1752 = vadd.f32 %v1661, %v1751
    %v1753 = vpop.f32.mrb[0].mxu0
    %1754 = vdwg.mxu0
    %1755 = vmatprep.subr.mxu0 0.0
    %v1756 = vand.u32 %v1571, 4294901760
    %v1757 = vsub.f32 %v1571, %v1756
    %1758 = vmatpush1.msra.mxu0 %v1757
    %1759 = vmatprep.subr.mxu0 0.0
    %v1760 = vand.u32 %v1572, 4294901760
    %v1761 = vsub.f32 %v1572, %v1760
    %1762 = vmatpush1.msra.mxu0 %v1761
    %1763 = vmatprep.subr.mxu0 0.0
    %v1764 = vand.u32 %v1573, 4294901760
    %v1765 = vsub.f32 %v1573, %v1764
    %1766 = vmatpush1.msra.mxu0 %v1765
    %1767 = vmatprep.subr.mxu0 0.0
    %v1768 = vand.u32 %v1574, 4294901760
    %v1769 = vsub.f32 %v1574, %v1768
    %1770 = vmatpush1.msra.mxu0 %v1769
    %1771 = vmatprep.subr.mxu0 0.0
    %1772 = vmatpush1.msra.mxu0 0.0
    %1773 = vmatprep.subr.mxu0 0.0
    %1774 = vmatpush1.msra.mxu0 0.0
    %1775 = vmatprep.subr.mxu0 0.0
    %1776 = vmatpush1.msra.mxu0 0.0
    %1777 = vmatprep.subr.mxu0 0.0
    %1778 = vmatpush1.msra.mxu0 0.0
    %1779 = vmatprep.subr.mxu0 0.0
    %1780 = vmatpush1.msra.mxu0 0.0
    %1781 = vmatprep.subr.mxu0 0.0
    %1782 = vmatpush1.msra.mxu0 0.0
    %1783 = vmatprep.subr.mxu0 0.0
    %1784 = vmatpush1.msra.mxu0 0.0
    %1785 = vmatprep.subr.mxu0 0.0
    %1786 = vmatpush1.msra.mxu0 0.0
    %1787 = vmatprep.subr.mxu0 0.0
    %1788 = vmatpush1.msra.mxu0 0.0
    %1789 = vmatprep.subr.mxu0 0.0
    %1790 = vmatpush1.msra.mxu0 0.0
    %1791 = vmatprep.subr.mxu0 0.0
    %1792 = vmatpush1.msra.mxu0 0.0
    %1793 = vmatprep.subr.mxu0 0.0
    %1794 = vmatpush1.msra.mxu0 0.0
    %1795 = vmatprep.subr.mxu0 0.0
    %1796 = vmatpush1.msra.mxu0 0.0
    %1797 = vmatprep.subr.mxu0 0.0
    %1798 = vmatpush1.msra.mxu0 0.0
    %1799 = vmatprep.subr.mxu0 0.0
    %1800 = vmatpush1.msra.mxu0 0.0
    %1801 = vmatprep.subr.mxu0 0.0
    %1802 = vmatpush1.msra.mxu0 0.0
    %1803 = vmatprep.subr.mxu0 0.0
    %1804 = vmatpush1.msra.mxu0 0.0
    %1805 = vmatprep.subr.mxu0 0.0
    %1806 = vmatpush1.msra.mxu0 0.0
    %1807 = vmatprep.subr.mxu0 0.0
    %1808 = vmatpush1.msra.mxu0 0.0
    %1809 = vmatprep.subr.mxu0 0.0
    %1810 = vmatpush1.msra.mxu0 0.0
    %1811 = vmatprep.subr.mxu0 0.0
    %1812 = vmatpush1.msra.mxu0 0.0
    %1813 = vmatprep.subr.mxu0 0.0
    %1814 = vmatpush1.msra.mxu0 0.0
    %1815 = vmatprep.subr.mxu0 0.0
    %1816 = vmatpush1.msra.mxu0 0.0
    %1817 = vmatprep.subr.mxu0 0.0
    %1818 = vmatpush1.msra.mxu0 0.0
    %1819 = vmatprep.subr.mxu0 0.0
    %1820 = vmatpush1.msra.mxu0 0.0
    %1821 = vmatprep.subr.mxu0 0.0
    %1822 = vmatpush1.msra.mxu0 0.0
    %1823 = vmatprep.subr.mxu0 0.0
    %1824 = vmatpush1.msra.mxu0 0.0
    %1825 = vmatprep.subr.mxu0 0.0
    %1826 = vmatpush1.msra.mxu0 0.0
    %1827 = vmatprep.mubr.f32.mxu0 0.0
    %v1828 = vand.u32 %v1583, 4294901760
    %v1829 = vsub.f32 %v1583, %v1828
    %1830 = vmatmul.mubr.f32.gmra.mrb[0].mxu0 %v1829
    %v1831 = vpop.f32.mrb[0].mxu0
    %v1832 = vadd.f32 %v1752, %v1831
    %v1833 = vpop.f32.mrb[0].mxu0
    %1834 = vdwg.mxu0
    %1835 = vmatprep.subr.mxu0 0.0
    %v1836 = vand.u32 %v1571, 4294901760
    %1837 = vmatpush1.msra.mxu0 %v1836
    %1838 = vmatprep.subr.mxu0 0.0
    %v1839 = vand.u32 %v1572, 4294901760
    %1840 = vmatpush1.msra.mxu0 %v1839
    %1841 = vmatprep.subr.mxu0 0.0
    %v1842 = vand.u32 %v1573, 4294901760
    %1843 = vmatpush1.msra.mxu0 %v1842
    %1844 = vmatprep.subr.mxu0 0.0
    %v1845 = vand.u32 %v1574, 4294901760
    %1846 = vmatpush1.msra.mxu0 %v1845
    %1847 = vmatprep.subr.mxu0 0.0
    %1848 = vmatpush1.msra.mxu0 0.0
    %1849 = vmatprep.subr.mxu0 0.0
    %1850 = vmatpush1.msra.mxu0 0.0
    %1851 = vmatprep.subr.mxu0 0.0
    %1852 = vmatpush1.msra.mxu0 0.0
    %1853 = vmatprep.subr.mxu0 0.0
    %1854 = vmatpush1.msra.mxu0 0.0
    %1855 = vmatprep.subr.mxu0 0.0
    %1856 = vmatpush1.msra.mxu0 0.0
    %1857 = vmatprep.subr.mxu0 0.0
    %1858 = vmatpush1.msra.mxu0 0.0
    %1859 = vmatprep.subr.mxu0 0.0
    %1860 = vmatpush1.msra.mxu0 0.0
    %1861 = vmatprep.subr.mxu0 0.0
    %1862 = vmatpush1.msra.mxu0 0.0
    %1863 = vmatprep.subr.mxu0 0.0
    %1864 = vmatpush1.msra.mxu0 0.0
    %1865 = vmatprep.subr.mxu0 0.0
    %1866 = vmatpush1.msra.mxu0 0.0
    %1867 = vmatprep.subr.mxu0 0.0
    %1868 = vmatpush1.msra.mxu0 0.0
    %1869 = vmatprep.subr.mxu0 0.0
    %1870 = vmatpush1.msra.mxu0 0.0
    %1871 = vmatprep.subr.mxu0 0.0
    %1872 = vmatpush1.msra.mxu0 0.0
    %1873 = vmatprep.subr.mxu0 0.0
    %1874 = vmatpush1.msra.mxu0 0.0
    %1875 = vmatprep.subr.mxu0 0.0
    %1876 = vmatpush1.msra.mxu0 0.0
    %1877 = vmatprep.subr.mxu0 0.0
    %1878 = vmatpush1.msra.mxu0 0.0
    %1879 = vmatprep.subr.mxu0 0.0
    %1880 = vmatpush1.msra.mxu0 0.0
    %1881 = vmatprep.subr.mxu0 0.0
    %1882 = vmatpush1.msra.mxu0 0.0
    %1883 = vmatprep.subr.mxu0 0.0
    %1884 = vmatpush1.msra.mxu0 0.0
    %1885 = vmatprep.subr.mxu0 0.0
    %1886 = vmatpush1.msra.mxu0 0.0
    %1887 = vmatprep.subr.mxu0 0.0
    %1888 = vmatpush1.msra.mxu0 0.0
    %1889 = vmatprep.subr.mxu0 0.0
    %1890 = vmatpush1.msra.mxu0 0.0
    %1891 = vmatprep.subr.mxu0 0.0
    %1892 = vmatpush1.msra.mxu0 0.0
    %1893 = vmatprep.subr.mxu0 0.0
    %1894 = vmatpush1.msra.mxu0 0.0
    %1895 = vmatprep.subr.mxu0 0.0
    %1896 = vmatpush1.msra.mxu0 0.0
    %1897 = vmatprep.subr.mxu0 0.0
    %1898 = vmatpush1.msra.mxu0 0.0
    %1899 = vmatprep.subr.mxu0 0.0
    %1900 = vmatpush1.msra.mxu0 0.0
    %1901 = vmatprep.subr.mxu0 0.0
    %1902 = vmatpush1.msra.mxu0 0.0
    %1903 = vmatprep.mubr.f32.mxu0 0.0
    %v1904 = vand.u32 %v1583, 4294901760
    %v1905 = vsub.f32 %v1583, %v1904
    %v1906 = vand.u32 %v1905, 4294901760
    %1907 = vmatmul.mubr.f32.gmra.mrb[0].mxu0 %v1906
    %v1908 = vpop.f32.mrb[0].mxu0
    %v1909 = vadd.f32 %v1832, %v1908
    %v1910 = vpop.f32.mrb[0].mxu0
    %1911 = vdwg.mxu0
    %1912 = vmatprep.subr.mxu0 0.0
    %v1913 = vand.u32 %v1571, 4294901760
    %v1914 = vsub.f32 %v1571, %v1913
    %v1915 = vand.u32 %v1914, 4294901760
    %1916 = vmatpush1.msra.mxu0 %v1915
    %1917 = vmatprep.subr.mxu0 0.0
    %v1918 = vand.u32 %v1572, 4294901760
    %v1919 = vsub.f32 %v1572, %v1918
    %v1920 = vand.u32 %v1919, 4294901760
    %1921 = vmatpush1.msra.mxu0 %v1920
    %1922 = vmatprep.subr.mxu0 0.0
    %v1923 = vand.u32 %v1573, 4294901760
    %v1924 = vsub.f32 %v1573, %v1923
    %v1925 = vand.u32 %v1924, 4294901760
    %1926 = vmatpush1.msra.mxu0 %v1925
    %1927 = vmatprep.subr.mxu0 0.0
    %v1928 = vand.u32 %v1574, 4294901760
    %v1929 = vsub.f32 %v1574, %v1928
    %v1930 = vand.u32 %v1929, 4294901760
    %1931 = vmatpush1.msra.mxu0 %v1930
    %1932 = vmatprep.subr.mxu0 0.0
    %1933 = vmatpush1.msra.mxu0 0.0
    %1934 = vmatprep.subr.mxu0 0.0
    %1935 = vmatpush1.msra.mxu0 0.0
    %1936 = vmatprep.subr.mxu0 0.0
    %1937 = vmatpush1.msra.mxu0 0.0
    %1938 = vmatprep.subr.mxu0 0.0
    %1939 = vmatpush1.msra.mxu0 0.0
    %1940 = vmatprep.subr.mxu0 0.0
    %1941 = vmatpush1.msra.mxu0 0.0
    %1942 = vmatprep.subr.mxu0 0.0
    %1943 = vmatpush1.msra.mxu0 0.0
    %1944 = vmatprep.subr.mxu0 0.0
    %1945 = vmatpush1.msra.mxu0 0.0
    %1946 = vmatprep.subr.mxu0 0.0
    %1947 = vmatpush1.msra.mxu0 0.0
    %1948 = vmatprep.subr.mxu0 0.0
    %1949 = vmatpush1.msra.mxu0 0.0
    %1950 = vmatprep.subr.mxu0 0.0
    %1951 = vmatpush1.msra.mxu0 0.0
    %1952 = vmatprep.subr.mxu0 0.0
    %1953 = vmatpush1.msra.mxu0 0.0
    %1954 = vmatprep.subr.mxu0 0.0
    %1955 = vmatpush1.msra.mxu0 0.0
    %1956 = vmatprep.subr.mxu0 0.0
    %1957 = vmatpush1.msra.mxu0 0.0
    %1958 = vmatprep.subr.mxu0 0.0
    %1959 = vmatpush1.msra.mxu0 0.0
    %1960 = vmatprep.subr.mxu0 0.0
    %1961 = vmatpush1.msra.mxu0 0.0
    %1962 = vmatprep.subr.mxu0 0.0
    %1963 = vmatpush1.msra.mxu0 0.0
    %1964 = vmatprep.subr.mxu0 0.0
    %1965 = vmatpush1.msra.mxu0 0.0
    %1966 = vmatprep.subr.mxu0 0.0
    %1967 = vmatpush1.msra.mxu0 0.0
    %1968 = vmatprep.subr.mxu0 0.0
    %1969 = vmatpush1.msra.mxu0 0.0
    %1970 = vmatprep.subr.mxu0 0.0
    %1971 = vmatpush1.msra.mxu0 0.0
    %1972 = vmatprep.subr.mxu0 0.0
    %1973 = vmatpush1.msra.mxu0 0.0
    %1974 = vmatprep.subr.mxu0 0.0
    %1975 = vmatpush1.msra.mxu0 0.0
    %1976 = vmatprep.subr.mxu0 0.0
    %1977 = vmatpush1.msra.mxu0 0.0
    %1978 = vmatprep.subr.mxu0 0.0
    %1979 = vmatpush1.msra.mxu0 0.0
    %1980 = vmatprep.subr.mxu0 0.0
    %1981 = vmatpush1.msra.mxu0 0.0
    %1982 = vmatprep.subr.mxu0 0.0
    %1983 = vmatpush1.msra.mxu0 0.0
    %1984 = vmatprep.subr.mxu0 0.0
    %1985 = vmatpush1.msra.mxu0 0.0
    %1986 = vmatprep.subr.mxu0 0.0
    %1987 = vmatpush1.msra.mxu0 0.0
    %1988 = vmatprep.mubr.f32.mxu0 0.0
    %v1989 = vand.u32 %v1583, 4294901760
    %1990 = vmatmul.mubr.f32.gmra.mrb[0].mxu0 %v1989
    %v1991 = vpop.f32.mrb[0].mxu0
    %v1992 = vadd.f32 %v1909, %v1991
    %v1993 = vpop.f32.mrb[0].mxu0
    %1994 = vdwg.mxu0
    %1995 = vmatprep.subr.mxu0 0.0
    %v1996 = vand.u32 %v1571, 4294901760
    %1997 = vmatpush1.msra.mxu0 %v1996
    %1998 = vmatprep.subr.mxu0 0.0
    %v1999 = vand.u32 %v1572, 4294901760
    %2000 = vmatpush1.msra.mxu0 %v1999
    %2001 = vmatprep.subr.mxu0 0.0
    %v2002 = vand.u32 %v1573, 4294901760
    %2003 = vmatpush1.msra.mxu0 %v2002
    %2004 = vmatprep.subr.mxu0 0.0
    %v2005 = vand.u32 %v1574, 4294901760
    %2006 = vmatpush1.msra.mxu0 %v2005
    %2007 = vmatprep.subr.mxu0 0.0
    %2008 = vmatpush1.msra.mxu0 0.0
    %2009 = vmatprep.subr.mxu0 0.0
    %2010 = vmatpush1.msra.mxu0 0.0
    %2011 = vmatprep.subr.mxu0 0.0
    %2012 = vmatpush1.msra.mxu0 0.0
    %2013 = vmatprep.subr.mxu0 0.0
    %2014 = vmatpush1.msra.mxu0 0.0
    %2015 = vmatprep.subr.mxu0 0.0
    %2016 = vmatpush1.msra.mxu0 0.0
    %2017 = vmatprep.subr.mxu0 0.0
    %2018 = vmatpush1.msra.mxu0 0.0
    %2019 = vmatprep.subr.mxu0 0.0
    %2020 = vmatpush1.msra.mxu0 0.0
    %2021 = vmatprep.subr.mxu0 0.0
    %2022 = vmatpush1.msra.mxu0 0.0
    %2023 = vmatprep.subr.mxu0 0.0
    %2024 = vmatpush1.msra.mxu0 0.0
    %2025 = vmatprep.subr.mxu0 0.0
    %2026 = vmatpush1.msra.mxu0 0.0
    %2027 = vmatprep.subr.mxu0 0.0
    %2028 = vmatpush1.msra.mxu0 0.0
    %2029 = vmatprep.subr.mxu0 0.0
    %2030 = vmatpush1.msra.mxu0 0.0
    %2031 = vmatprep.subr.mxu0 0.0
    %2032 = vmatpush1.msra.mxu0 0.0
    %2033 = vmatprep.subr.mxu0 0.0
    %2034 = vmatpush1.msra.mxu0 0.0
    %2035 = vmatprep.subr.mxu0 0.0
    %2036 = vmatpush1.msra.mxu0 0.0
    %2037 = vmatprep.subr.mxu0 0.0
    %2038 = vmatpush1.msra.mxu0 0.0
    %2039 = vmatprep.subr.mxu0 0.0
    %2040 = vmatpush1.msra.mxu0 0.0
    %2041 = vmatprep.subr.mxu0 0.0
    %2042 = vmatpush1.msra.mxu0 0.0
    %2043 = vmatprep.subr.mxu0 0.0
    %2044 = vmatpush1.msra.mxu0 0.0
    %2045 = vmatprep.subr.mxu0 0.0
    %2046 = vmatpush1.msra.mxu0 0.0
    %2047 = vmatprep.subr.mxu0 0.0
    %2048 = vmatpush1.msra.mxu0 0.0
    %2049 = vmatprep.subr.mxu0 0.0
    %2050 = vmatpush1.msra.mxu0 0.0
    %2051 = vmatprep.subr.mxu0 0.0
    %2052 = vmatpush1.msra.mxu0 0.0
    %2053 = vmatprep.subr.mxu0 0.0
    %2054 = vmatpush1.msra.mxu0 0.0
    %2055 = vmatprep.subr.mxu0 0.0
    %2056 = vmatpush1.msra.mxu0 0.0
    %2057 = vmatprep.subr.mxu0 0.0
    %2058 = vmatpush1.msra.mxu0 0.0
    %2059 = vmatprep.subr.mxu0 0.0
    %2060 = vmatpush1.msra.mxu0 0.0
    %2061 = vmatprep.subr.mxu0 0.0
    %2062 = vmatpush1.msra.mxu0 0.0
    %2063 = vmatprep.mubr.f32.mxu0 0.0
    %v2064 = vand.u32 %v1583, 4294901760
    %2065 = vmatmul.mubr.f32.gmra.mrb[0].mxu0 %v2064
    %v2066 = vpop.f32.mrb[0].mxu0
    %v2067 = vadd.f32 %v1992, %v2066
    %v2068 = vpop.f32.mrb[0].mxu0
    %2069 = vdwg.mxu0
    %vm2070 = vcmask 31744
    %2071 = vst.msk [vmem:[%s9] sm:$0xff] %vm2070, %v2067
    // Predicated region
    $region46: #{tpu_custom_call.1} parent=1 // pred_check
      _
    $region47: #{tpu_custom_call.1} parent=1 // pred_check_branch
      %2073 = sbr.rel (0) target = $region49
    $region48: #{tpu_custom_call.1} parent=1 // pred_region
      _
    $region49: #{tpu_custom_call.1} parent=1 // pred_fallthru
      _
    // Predicated region
    $region50: #{tpu_custom_call.1} parent=1 // pred_check
      _
    $region51: #{tpu_custom_call.1} parent=1 // pred_check_branch
      %2075 = sbr.rel (0) target = $region53
    $region52: #{tpu_custom_call.1} parent=1 // pred_region
      _
    $region53: #{tpu_custom_call.1} parent=1 // pred_fallthru
      _
    %2076 = vsyncpa [#allocation3], 1
    %2077 = vsyncpa [#allocation5], 1

</llo_original>
